<compile_context>
chip_gen: v5e
topology: v5e:2x2
jax: 0.10.0
libtpu: 0.0.40
codegen_flags: <defaults>
</compile_context>

<pallas_src>
import functools

import jax
import jax.numpy as jnp
from jax.experimental import pallas as pl
from jax.experimental.pallas import tpu as pltpu


def _round_up(x, m):
    return (x + m - 1) // m * m


def _make_conv_kernel(k_size, stride, cin_p, ho, wo):
    """Builds the per-image conv kernel (all tap slices are static)."""
    h_span = stride * (ho - 1) + 1
    w_span = stride * (wo - 1) + 1
    m = ho * wo

    def kernel(x_ref, w_ref, o_ref):
        # x_ref : (1, Cin_p, Hp, Wp)      padded NCHW image (one batch element)
        # w_ref : (Cout_p, k*k*Cin_p)     tap-flattened weight matrix
        # o_ref : (1, Cout_p, Ho*Wo)      lane-dense output tile (NCHW-flat)
        taps = []
        for kh in range(k_size):
            xh = x_ref[0, :, kh:kh + h_span, :]          # (Cin_p, h_span, Wp)
            if stride > 1:
                xh = xh[:, ::stride, :]                  # (Cin_p, Ho, Wp)
            for kw in range(k_size):
                win = xh[:, :, kw:kw + w_span]           # (Cin_p, Ho, w_span)
                if stride > 1:
                    win = win[:, :, ::stride]            # (Cin_p, Ho, Wo)
                taps.append(win.reshape(cin_p, m))       # (Cin_p, M)
        # (k*k*Cin_p, M): concat offsets are multiples of 8 (Cin_p % 8 == 0),
        # so the stack is sublane-tile aligned.
        a = jnp.concatenate(taps, axis=0)
        # Single MXU matmul per image; contraction over all taps * channels.
        o_ref[0] = jnp.dot(
            w_ref[...], a, preferred_element_type=jnp.float32
        ).astype(o_ref.dtype)

    return kernel


@functools.partial(jax.jit, static_argnames=("k_size", "stride"))
def conv2d_c(x_nchw, weight, *, k_size, stride=1):
    """Forward of module C.

    x_nchw: [N, Cin, H, W] float32
    weight: [Cout, Cin, kH, kW] float32 (PyTorch conv weight layout)
    returns [N, Cout, Ho, Wo] float32
    """
    N, Cin, H, W = x_nchw.shape
    Cout = weight.shape[0]
    pad = (k_size - 1) // 2
    Ho = (H + 2 * pad - k_size) // stride + 1
    Wo = (W + 2 * pad - k_size) // stride + 1
    Hp, Wp = H + 2 * pad, W + 2 * pad

    Cin_p = _round_up(Cin, 8)     # sublane-aligned tap slabs
    Cout_p = _round_up(Cout, 8)   # sublane-aligned output rows
    KKC = k_size * k_size * Cin_p
    M = Ho * Wo

    # Spatial zero-pad + channel zero-pad; input stays NCHW (no transpose).
    xp = jnp.pad(x_nchw,
                 ((0, 0), (0, Cin_p - Cin), (pad, pad), (pad, pad)))

    # Weight (Cout, Cin, kH, kW) -> (Cout, kH, kW, Cin_p) -> (Cout_p, k*k*Cin_p).
    # Ordering of the flattened contraction dim matches the kernel's tap stack
    # (kh, kw, cin); padded channels/rows are zero so they contribute nothing.
    wt = jnp.transpose(weight, (0, 2, 3, 1))
    wt = jnp.pad(wt, ((0, 0), (0, 0), (0, 0), (0, Cin_p - Cin)))
    wt = wt.reshape(Cout, KKC)
    wt = jnp.pad(wt, ((0, Cout_p - Cout), (0, 0)))

    kernel = _make_conv_kernel(k_size, stride, Cin_p, Ho, Wo)

    flops = 2 * N * M * KKC * Cout_p
    bytes_accessed = 4 * (xp.size + wt.size + N * Cout_p * M)

    out = pl.pallas_call(
        kernel,
        out_shape=jax.ShapeDtypeStruct((N, Cout_p, M), jnp.float32),
        grid_spec=pltpu.PrefetchScalarGridSpec(
            num_scalar_prefetch=0,
            grid=(N,),
            in_specs=[
                # One padded image per grid step; reused for all k*k taps.
                pl.BlockSpec((1, Cin_p, Hp, Wp), lambda n: (n, 0, 0, 0)),
                # Flattened weight matrix, resident across the whole grid.
                pl.BlockSpec((Cout_p, KKC), lambda n: (0, 0)),
            ],
            out_specs=pl.BlockSpec((1, Cout_p, M), lambda n: (n, 0, 0)),
        ),
        compiler_params=pltpu.CompilerParams(
            dimension_semantics=("parallel",),
        ),
        cost_estimate=pl.CostEstimate(
            flops=flops, transcendentals=0, bytes_accessed=bytes_accessed),
    )(xp, wt)

    # Drop channel padding (no-op when Cout % 8 == 0) and un-flatten spatial:
    # result is already NCHW, no transpose needed.
    return out[:, :Cout, :].reshape(N, Cout, Ho, Wo)


if __name__ == "__main__":
    # Small deterministic example: nIn=4, nOut=8, kSize=3, stride=1
    N, Cin, H, W = 2, 4, 16, 16
    Cout, kSize, stride = 8, 3, 1

    key = jax.random.PRNGKey(0)
    kx, kw = jax.random.split(key)
    x = jax.random.normal(kx, (N, Cin, H, W), dtype=jnp.float32)
    # Deterministic Kaiming-uniform-like init for Conv2d weight (bias=False).
    fan_in = Cin * kSize * kSize
    bound = 1.0 / (fan_in ** 0.5)
    w = jax.random.uniform(
        kw, (Cout, Cin, kSize, kSize), dtype=jnp.float32,
        minval=-bound, maxval=bound,
    )

    y = conv2d_c(x, w, k_size=kSize, stride=stride)
    y = jax.block_until_ready(y)

    # Sanity check against XLA's reference convolution.
    y_ref = jax.lax.conv_general_dilated(
        x, w, window_strides=(stride, stride),
        padding=[((kSize - 1) // 2, (kSize - 1) // 2)] * 2,
        dimension_numbers=("NCHW", "OIHW", "NCHW"),
    )
    assert y.shape == y_ref.shape
    assert jnp.allclose(y, y_ref, rtol=1e-4, atol=1e-3)

    print("KERNEL_OK")
</pallas_src>

<mosaic_0001>
module attributes {stable_mosaic.version = 11 : i64} {
  func.func @kernel(%arg0: i32, %arg1: memref<1x8x18x18xf32, #tpu.memory_space<vmem>>, %arg2: memref<8x72xf32, #tpu.memory_space<vmem>>, %arg3: memref<1x8x256xf32, #tpu.memory_space<vmem>>) attributes {dimension_semantics = [#tpu.dimension_semantics<parallel>], iteration_bounds = array<i64: 2>, scalar_prefetch = 0 : i64, scratch_operands = 0 : i64, tpu.core_type = #tpu.core_type<tc>, window_params = [{transform_indices = @transform_0, window_bounds = array<i64: 1, 8, 18, 18>}, {pipeline_mode = #tpu.pipeline_mode<synchronous>, transform_indices = @transform_1, window_bounds = array<i64: 8, 72>}, {transform_indices = @transform_2, window_bounds = array<i64: 1, 8, 256>}]} {
    %c0 = arith.constant 0 : index
    %c0_0 = arith.constant 0 : index
    %c0_1 = arith.constant 0 : index
    %c0_2 = arith.constant 0 : index
    %0 = vector.load %arg1[%c0, %c0_0, %c0_1, %c0_2] : memref<1x8x18x18xf32, #tpu.memory_space<vmem>>, vector<1x8x16x18xf32>
    %1 = vector.shape_cast %0 : vector<1x8x16x18xf32> to vector<8x16x18xf32>
    %2 = vector.extract_strided_slice %1 {offsets = [0, 0, 0], sizes = [8, 16, 16], strides = [1, 1, 1]} : vector<8x16x18xf32> to vector<8x16x16xf32>
    %3 = vector.shape_cast %2 : vector<8x16x16xf32> to vector<8x256xf32>
    %4 = vector.extract_strided_slice %1 {offsets = [0, 0, 1], sizes = [8, 16, 16], strides = [1, 1, 1]} : vector<8x16x18xf32> to vector<8x16x16xf32>
    %5 = vector.shape_cast %4 : vector<8x16x16xf32> to vector<8x256xf32>
    %6 = vector.extract_strided_slice %1 {offsets = [0, 0, 2], sizes = [8, 16, 16], strides = [1, 1, 1]} : vector<8x16x18xf32> to vector<8x16x16xf32>
    %7 = vector.shape_cast %6 : vector<8x16x16xf32> to vector<8x256xf32>
    %c0_3 = arith.constant 0 : index
    %c0_4 = arith.constant 0 : index
    %c1 = arith.constant 1 : index
    %c0_5 = arith.constant 0 : index
    %8 = vector.load %arg1[%c0_3, %c0_4, %c1, %c0_5] : memref<1x8x18x18xf32, #tpu.memory_space<vmem>>, vector<1x8x16x18xf32>
    %9 = vector.shape_cast %8 : vector<1x8x16x18xf32> to vector<8x16x18xf32>
    %10 = vector.extract_strided_slice %9 {offsets = [0, 0, 0], sizes = [8, 16, 16], strides = [1, 1, 1]} : vector<8x16x18xf32> to vector<8x16x16xf32>
    %11 = vector.shape_cast %10 : vector<8x16x16xf32> to vector<8x256xf32>
    %12 = vector.extract_strided_slice %9 {offsets = [0, 0, 1], sizes = [8, 16, 16], strides = [1, 1, 1]} : vector<8x16x18xf32> to vector<8x16x16xf32>
    %13 = vector.shape_cast %12 : vector<8x16x16xf32> to vector<8x256xf32>
    %14 = vector.extract_strided_slice %9 {offsets = [0, 0, 2], sizes = [8, 16, 16], strides = [1, 1, 1]} : vector<8x16x18xf32> to vector<8x16x16xf32>
    %15 = vector.shape_cast %14 : vector<8x16x16xf32> to vector<8x256xf32>
    %c0_6 = arith.constant 0 : index
    %c0_7 = arith.constant 0 : index
    %c2 = arith.constant 2 : index
    %c0_8 = arith.constant 0 : index
    %16 = vector.load %arg1[%c0_6, %c0_7, %c2, %c0_8] : memref<1x8x18x18xf32, #tpu.memory_space<vmem>>, vector<1x8x16x18xf32>
    %17 = vector.shape_cast %16 : vector<1x8x16x18xf32> to vector<8x16x18xf32>
    %18 = vector.extract_strided_slice %17 {offsets = [0, 0, 0], sizes = [8, 16, 16], strides = [1, 1, 1]} : vector<8x16x18xf32> to vector<8x16x16xf32>
    %19 = vector.shape_cast %18 : vector<8x16x16xf32> to vector<8x256xf32>
    %20 = vector.extract_strided_slice %17 {offsets = [0, 0, 1], sizes = [8, 16, 16], strides = [1, 1, 1]} : vector<8x16x18xf32> to vector<8x16x16xf32>
    %21 = vector.shape_cast %20 : vector<8x16x16xf32> to vector<8x256xf32>
    %22 = vector.extract_strided_slice %17 {offsets = [0, 0, 2], sizes = [8, 16, 16], strides = [1, 1, 1]} : vector<8x16x18xf32> to vector<8x16x16xf32>
    %23 = vector.shape_cast %22 : vector<8x16x16xf32> to vector<8x256xf32>
    %24 = tpu.concatenate %3, %5, %7, %11, %13, %15, %19, %21, %23 in 0 : vector<8x256xf32>, vector<8x256xf32>, vector<8x256xf32>, vector<8x256xf32>, vector<8x256xf32>, vector<8x256xf32>, vector<8x256xf32>, vector<8x256xf32>, vector<8x256xf32> -> vector<72x256xf32>
    %c0_9 = arith.constant 0 : index
    %c0_10 = arith.constant 0 : index
    %25 = vector.load %arg2[%c0_9, %c0_10] : memref<8x72xf32, #tpu.memory_space<vmem>>, vector<8x72xf32>
    %cst = arith.constant dense<0.000000e+00> : vector<8x256xf32>
    %26 = tpu.matmul %25, %24, %cst {dimension_numbers = #tpu.dot_dimension_numbers<[1], [0], [0], [1], [0, 0, 1, 1], [], []>} : vector<8x72xf32>, vector<72x256xf32>, vector<8x256xf32> -> vector<8x256xf32>
    %c0_11 = arith.constant 0 : index
    %c0_12 = arith.constant 0 : index
    %c0_13 = arith.constant 0 : index
    %27 = vector.load %arg3[%c0_11, %c0_12, %c0_13] : memref<1x8x256xf32, #tpu.memory_space<vmem>>, vector<1x8x256xf32>
    %28 = vector.shape_cast %27 : vector<1x8x256xf32> to vector<8x256xf32>
    %29 = vector.shape_cast %26 : vector<8x256xf32> to vector<1x8x256xf32>
    tpu.vector_store %arg3[%c0_11, %c0_12, %c0_13], %29 {strides = array<i32>} : memref<1x8x256xf32, #tpu.memory_space<vmem>>, vector<1x8x256xf32>,
    return
  }
  func.func @transform_0(%arg0: i32) -> (i32, i32, i32, i32) {
    %c0_i32 = arith.constant 0 : i32
    %c0_i32_0 = arith.constant 0 : i32
    %c0_i32_1 = arith.constant 0 : i32
    %c0_i32_2 = arith.constant 0 : i32
    return %arg0, %c0_i32, %c0_i32_0, %c0_i32_1 : i32, i32, i32, i32
  }
  func.func @transform_1(%arg0: i32) -> (i32, i32) {
    %c0_i32 = arith.constant 0 : i32
    %c0_i32_0 = arith.constant 0 : i32
    %c0_i32_1 = arith.constant 0 : i32
    return %c0_i32, %c0_i32_0 : i32, i32
  }
  func.func @transform_2(%arg0: i32) -> (i32, i32, i32) {
    %c0_i32 = arith.constant 0 : i32
    %c0_i32_0 = arith.constant 0 : i32
    %c0_i32_1 = arith.constant 0 : i32
    return %arg0, %c0_i32, %c0_i32_0 : i32, i32, i32
  }
}

</mosaic_0001>

<llo_original>
// kernel: conv2d_c.1
$region0: #{conv2d_c.1}
  #allocation0 [shape = 'u32[]', space=smem, size = 0x4, offset = 0x4, fixed_abs, tag = 'smem constant byte address 0x4 - core index']
  #allocation1 [shape = 'u32[72,128]{1,0:T(1,128)}', space=vmem, size = 0x9000, scoped, tag = 'internal scratch']
  %s0 = inlined_call_operand.vmem [shape: f32[2,8,18,18], index: 0, kind: input, shape index: {}]
  %s1 = inlined_call_operand.vmem [shape: f32[8,72], index: 1, kind: input, shape index: {}]
  %s2 = inlined_call_operand.vmem [shape: f32[2,8,256], index: 2, kind: output, shape index: {}]
  %s3 = sld [smem:[#allocation0]]
  $region41: #{conv2d_c.1} parent=0
    _
  %s5 = ssub.s32 1, %s3
  %s6 = scalar_select 0, %s5, %s3
  loop: start=0, step=1, limit=4
  $region2: #{conv2d_c.1} parent=0 // loop_pre_header
    _
  $region3: #{conv2d_c.1} parent=0 // loop_header
    %s8 = sphi 0, %s12
    %p9 = scmp.ge.s32.totalorder %s8, 4
    %s18 = sphi 0, %s20
    %s21 = sphi 0, %s18
    %s22 = sphi 0, %s21
    %s38 = sphi 0, %s22
    %s42 = sphi 0, %s42
    %s44 = sphi 0, %s42
    %s45 = sphi 0, %s44
    %s59 = sphi 0, %s45
    %s65 = sphi 0, %s67
    %s68 = sphi 0, %s65
    %s69 = sphi 0, %s68
    %s85 = sphi 0, %s69
  $region4: #{conv2d_c.1} parent=0 // loop_header_branch
    %11 = sbr.rel (%p9) target = $region8
  $region5: #{conv2d_c.1} parent=0 // loop_body
    %s13 = ssub.s32 %s8, 1
    %s14 = ssub.s32 %s8, 2
    %s15 = sadd.s32 %s8, 1
    %s16 = ssub.s32 %s8, %s15
    %p17 = scmp.eq.s32.totalorder %s16, 0
    %s19 = sadd.s32 %s18, 1
    %s20 = scalar_select %p17, %s18, %s19
    %p23 = pneg %p17
    %p24 = scmp.eq.s32.totalorder %s8, 1
    %p25 = por %p23, %p24
    %p26 = scmp.ne.s32.totalorder %s18, %s21
    %p27 = scmp.eq.s32.totalorder %s8, 0
    %p28 = por %p26, %p27
    %p29 = scmp.ne.s32.totalorder %s18, %s21
    %p30 = scmp.eq.s32.totalorder %s13, 1
    %p31 = por %p29, %p30
    %p32 = scmp.ne.s32.totalorder %s21, %s22
    %p33 = scmp.eq.s32.totalorder %s13, 0
    %p34 = por %p32, %p33
    %p35 = scmp.ne.s32.totalorder %s21, %s22
    %p36 = scmp.eq.s32.totalorder %s14, 1
    %p37 = por %p35, %p36
    %p39 = scmp.ne.s32.totalorder %s22, %s38
    %p40 = scmp.eq.s32.totalorder %s14, 0
    %p41 = por %p39, %p40
    %s43 = sadd.s32 %s42, 1
    %p46 = scmp.eq.s32.totalorder %s8, 1
    %p47 = scmp.ne.s32.totalorder %s42, %s44
    %p48 = scmp.eq.s32.totalorder %s8, 0
    %p49 = por %p47, %p48
    %p50 = scmp.ne.s32.totalorder %s42, %s44
    %p51 = scmp.eq.s32.totalorder %s13, 1
    %p52 = por %p50, %p51
    %p53 = scmp.ne.s32.totalorder %s44, %s45
    %p54 = scmp.eq.s32.totalorder %s13, 0
    %p55 = por %p53, %p54
    %p56 = scmp.ne.s32.totalorder %s44, %s45
    %p57 = scmp.eq.s32.totalorder %s14, 1
    %p58 = por %p56, %p57
    %p60 = scmp.ne.s32.totalorder %s45, %s59
    %p61 = scmp.eq.s32.totalorder %s14, 0
    %p62 = por %p60, %p61
    %s63 = ssub.s32 %s8, %s15
    %p64 = scmp.eq.s32.totalorder %s63, 0
    %s66 = sadd.s32 %s65, 1
    %s67 = scalar_select %p64, %s65, %s66
    %p70 = pneg %p64
    %p71 = scmp.eq.s32.totalorder %s8, 1
    %p72 = por %p70, %p71
    %p73 = scmp.ne.s32.totalorder %s65, %s68
    %p74 = scmp.eq.s32.totalorder %s8, 0
    %p75 = por %p73, %p74
    %p76 = scmp.ne.s32.totalorder %s65, %s68
    %p77 = scmp.eq.s32.totalorder %s13, 1
    %p78 = por %p76, %p77
    %p79 = scmp.ne.s32.totalorder %s68, %s69
    %p80 = scmp.eq.s32.totalorder %s13, 0
    %p81 = por %p79, %p80
    %p82 = scmp.ne.s32.totalorder %s68, %s69
    %p83 = scmp.eq.s32.totalorder %s14, 1
    %p84 = por %p82, %p83
    %p86 = scmp.ne.s32.totalorder %s69, %s85
    %p87 = scmp.eq.s32.totalorder %s14, 0
    %p88 = por %p86, %p87
    %p89 = scmp.le.s32.totalorder 1, %s8
    %p90 = scmp.lt.s32.totalorder %s8, 3
    %p91 = pnand %p89, %p90
    %p92 = pneg %p91
    // Predicated region
    $region9: #{conv2d_c.1} parent=5 // pred_check
      _
    $region10: #{conv2d_c.1} parent=5 // pred_check_branch
      %94 = sbr.rel (%p91) target = $region12
    $region11: #{conv2d_c.1} parent=5 // pred_region
      %s95 = ssub.s32 %s8, 1
      // Predicated region
      $region13: #{conv2d_c.1} parent=11 // pred_check
        %p96 = pneg %p55
      $region14: #{conv2d_c.1} parent=11 // pred_check_branch
        %98 = sbr.rel (%p96) target = $region16
      $region15: #{conv2d_c.1} parent=11 // pred_region
        _
      $region16: #{conv2d_c.1} parent=11 // pred_fallthru
        _
    $region12: #{conv2d_c.1} parent=5 // pred_fallthru
      _
    %p99 = scmp.lt.s32.totalorder %s8, 2
    // Predicated region
    $region17: #{conv2d_c.1} parent=5 // pred_check
      %p100 = pneg %p99
    $region18: #{conv2d_c.1} parent=5 // pred_check_branch
      %102 = sbr.rel (%p100) target = $region20
    $region19: #{conv2d_c.1} parent=5 // pred_region
      // Predicated region
      $region21: #{conv2d_c.1} parent=19 // pred_check
        %p103 = pneg %p28
      $region22: #{conv2d_c.1} parent=19 // pred_check_branch
        %105 = sbr.rel (%p103) target = $region24
      $region23: #{conv2d_c.1} parent=19 // pred_region
        %p106 = scmp.lt.s32.totalorder %s8, 1
        %s107 = scalar_select %p106, %s8, 1
        %s108 = smul.addr %s107, 24
        %s109 = smul.addr %s108, 8
        %s110 = scalar_lea.vmem %s0, %s109
      $region24: #{conv2d_c.1} parent=19 // pred_fallthru
        _
    $region20: #{conv2d_c.1} parent=5 // pred_fallthru
      _
    %p111 = scmp.le.s32.totalorder 1, %s8
    %p112 = scmp.lt.s32.totalorder %s8, 3
    %p113 = pnand %p111, %p112
    %p114 = pneg %p113
    // Predicated region
    $region25: #{conv2d_c.1} parent=5 // pred_check
      _
    $region26: #{conv2d_c.1} parent=5 // pred_check_branch
      %116 = sbr.rel (%p113) target = $region28
    $region27: #{conv2d_c.1} parent=5 // pred_region
      %s117 = ssub.s32 %s8, 1
      %p118 = scmp.lt.s32.totalorder %s13, 1
      %s119 = scalar_select %p118, %s13, 1
      %s120 = smul.addr %s119, 24
      %s121 = smul.addr %s120, 8
      %s122 = scalar_lea.vmem %s0, %s121
      %p123 = pneg %p34
      %p124 = pneg %p31
      %p125 = pneg %p55
      %p126 = pneg %p52
      %p127 = pneg %p81
      %p128 = pneg %p78
      %p129 = scmp.lt.s32.totalorder %s13, 1
      %s130 = scalar_select %p129, %s13, 1
      %s131 = smul.addr %s130, 2
      %s132 = smul.addr %s131, 8
      %s133 = scalar_lea.vmem %s2, %s132
      %p134 = scmp.lt.s32.totalorder %s13, 1
      %s135 = scalar_select %p134, %s13, 1
      %s136 = smul.addr %s135, 24
      %s137 = smul.addr %s136, 8
      %s138 = scalar_lea.vmem %s0, %s137
      %p139 = scmp.lt.s32.totalorder %s13, 1
      %s140 = scalar_select %p139, %s13, 1
      %s141 = smul.addr %s140, 2
      %s142 = smul.addr %s141, 8
      %s143 = scalar_lea.vmem %s2, %s142
      %v144 = vld [vmem:[%s138] sm:$0xff]
      %v145 = vld [vmem:[%s138 + $0x8] sm:$0xff]
      %v146 = vld [vmem:[%s138 + $0x18] sm:$0xff]
      %v147 = vld [vmem:[%s138 + $0x20] sm:$0xff]
      %v148 = vld [vmem:[%s138 + $0x30] sm:$0xff]
      %v149 = vld [vmem:[%s138 + $0x38] sm:$0xff]
      %v150 = vld [vmem:[%s138 + $0x48] sm:$0xff]
      %v151 = vld [vmem:[%s138 + $0x50] sm:$0xff]
      %v152 = vld [vmem:[%s138 + $0x60] sm:$0xff]
      %v153 = vld [vmem:[%s138 + $0x68] sm:$0xff]
      %v154 = vld [vmem:[%s138 + $0x78] sm:$0xff]
      %v155 = vld [vmem:[%s138 + $0x80] sm:$0xff]
      %v156 = vld [vmem:[%s138 + $0x90] sm:$0xff]
      %v157 = vld [vmem:[%s138 + $0x98] sm:$0xff]
      %v158 = vld [vmem:[%s138 + $0xa8] sm:$0xff]
      %v159 = vld [vmem:[%s138 + $0xb0] sm:$0xff]
      %v160 = vrot.slane %v148, 4
      %vm161 = vcmask 1047556
      %v162 = vsel %vm161, %v160, %v144
      %v163 = vrot.slane %v144, 4
      %v164 = vsel %vm161, %v148, %v163
      %v166 = vunpack.c.l.s4 1983009808
      %v167 = vunpack.c.0.s8 %v166
      %v168 = vperm.slane %v162, %v167
      %v170 = vunpack.c.l.s4 1983009808
      %v171 = vunpack.c.0.s8 %v170
      %v172 = vperm.slane %v164, %v171
      %v173 = vrot.slane %v150, 4
      %v174 = vsel %vm161, %v173, %v146
      %v175 = vrot.slane %v146, 4
      %v176 = vsel %vm161, %v150, %v175
      %v178 = vunpack.c.l.s4 1983009808
      %v179 = vunpack.c.0.s8 %v178
      %v180 = vperm.slane %v174, %v179
      %v182 = vunpack.c.l.s4 1983009808
      %v183 = vunpack.c.0.s8 %v182
      %v184 = vperm.slane %v176, %v183
      %v185 = vrot.slane %v156, 4
      %v186 = vsel %vm161, %v185, %v152
      %v187 = vrot.slane %v152, 4
      %v188 = vsel %vm161, %v156, %v187
      %v190 = vunpack.c.l.s4 1983009808
      %v191 = vunpack.c.0.s8 %v190
      %v192 = vperm.slane %v186, %v191
      %v194 = vunpack.c.l.s4 1983009808
      %v195 = vunpack.c.0.s8 %v194
      %v196 = vperm.slane %v188, %v195
      %v197 = vrot.slane %v158, 4
      %v198 = vsel %vm161, %v197, %v154
      %v199 = vrot.slane %v154, 4
      %v200 = vsel %vm161, %v158, %v199
      %v202 = vunpack.c.l.s4 1983009808
      %v203 = vunpack.c.0.s8 %v202
      %v204 = vperm.slane %v198, %v203
      %v206 = vunpack.c.l.s4 1983009808
      %v207 = vunpack.c.0.s8 %v206
      %v208 = vperm.slane %v200, %v207
      %v209 = vrot.slane %v180, 4
      %v210 = vsel %vm161, %v209, %v168
      %v211 = vrot.slane %v168, 4
      %v212 = vsel %vm161, %v180, %v211
      %v214 = vunpack.c.l.s4 1934713408
      %v215 = vunpack.c.0.s8 %v214
      %v216 = vperm.slane %v210, %v215
      %v218 = vunpack.c.l.s4 1934713408
      %v219 = vunpack.c.0.s8 %v218
      %v220 = vperm.slane %v212, %v219
      %v221 = vrot.slane %v184, 4
      %v222 = vsel %vm161, %v221, %v172
      %v223 = vrot.slane %v172, 4
      %v224 = vsel %vm161, %v184, %v223
      %v226 = vunpack.c.l.s4 1934713408
      %v227 = vunpack.c.0.s8 %v226
      %v228 = vperm.slane %v222, %v227
      %v230 = vunpack.c.l.s4 1934713408
      %v231 = vunpack.c.0.s8 %v230
      %v232 = vperm.slane %v224, %v231
      %v233 = vrot.slane %v204, 4
      %v234 = vsel %vm161, %v233, %v192
      %v235 = vrot.slane %v192, 4
      %v236 = vsel %vm161, %v204, %v235
      %v238 = vunpack.c.l.s4 1934713408
      %v239 = vunpack.c.0.s8 %v238
      %v240 = vperm.slane %v234, %v239
      %v242 = vunpack.c.l.s4 1934713408
      %v243 = vunpack.c.0.s8 %v242
      %v244 = vperm.slane %v236, %v243
      %v245 = vrot.slane %v208, 4
      %v246 = vsel %vm161, %v245, %v196
      %v247 = vrot.slane %v196, 4
      %v248 = vsel %vm161, %v208, %v247
      %v250 = vunpack.c.l.s4 1934713408
      %v251 = vunpack.c.0.s8 %v250
      %v252 = vperm.slane %v246, %v251
      %v254 = vunpack.c.l.s4 1934713408
      %v255 = vunpack.c.0.s8 %v254
      %v256 = vperm.slane %v248, %v255
      %v257 = vrot.slane %v240, 4
      %v258 = vsel %vm161, %v257, %v216
      %v259 = vrot.slane %v216, 4
      %v260 = vsel %vm161, %v240, %v259
      %v261 = vrot.slane %v244, 4
      %v262 = vsel %vm161, %v261, %v220
      %v263 = vrot.slane %v220, 4
      %v264 = vsel %vm161, %v244, %v263
      %v265 = vrot.slane %v252, 4
      %v266 = vsel %vm161, %v265, %v228
      %v267 = vrot.slane %v228, 4
      %v268 = vsel %vm161, %v252, %v267
      %v269 = vrot.slane %v256, 4
      %v270 = vsel %vm161, %v269, %v232
      %v271 = vrot.slane %v232, 4
      %v272 = vsel %vm161, %v256, %v271
      %v273 = vrot.slane %v149, 4
      %v274 = vsel %vm161, %v273, %v145
      %v275 = vrot.slane %v145, 4
      %v276 = vsel %vm161, %v149, %v275
      %v278 = vunpack.c.l.s4 1983009808
      %v279 = vunpack.c.0.s8 %v278
      %v280 = vperm.slane %v274, %v279
      %v282 = vunpack.c.l.s4 1983009808
      %v283 = vunpack.c.0.s8 %v282
      %v284 = vperm.slane %v276, %v283
      %v285 = vrot.slane %v151, 4
      %v286 = vsel %vm161, %v285, %v147
      %v287 = vrot.slane %v147, 4
      %v288 = vsel %vm161, %v151, %v287
      %v290 = vunpack.c.l.s4 1983009808
      %v291 = vunpack.c.0.s8 %v290
      %v292 = vperm.slane %v286, %v291
      %v294 = vunpack.c.l.s4 1983009808
      %v295 = vunpack.c.0.s8 %v294
      %v296 = vperm.slane %v288, %v295
      %v297 = vrot.slane %v157, 4
      %v298 = vsel %vm161, %v297, %v153
      %v299 = vrot.slane %v153, 4
      %v300 = vsel %vm161, %v157, %v299
      %v302 = vunpack.c.l.s4 1983009808
      %v303 = vunpack.c.0.s8 %v302
      %v304 = vperm.slane %v298, %v303
      %v306 = vunpack.c.l.s4 1983009808
      %v307 = vunpack.c.0.s8 %v306
      %v308 = vperm.slane %v300, %v307
      %v309 = vrot.slane %v159, 4
      %v310 = vsel %vm161, %v309, %v155
      %v311 = vrot.slane %v155, 4
      %v312 = vsel %vm161, %v159, %v311
      %v314 = vunpack.c.l.s4 1983009808
      %v315 = vunpack.c.0.s8 %v314
      %v316 = vperm.slane %v310, %v315
      %v318 = vunpack.c.l.s4 1983009808
      %v319 = vunpack.c.0.s8 %v318
      %v320 = vperm.slane %v312, %v319
      %v321 = vrot.slane %v292, 4
      %v322 = vsel %vm161, %v321, %v280
      %v323 = vrot.slane %v280, 4
      %v324 = vsel %vm161, %v292, %v323
      %v326 = vunpack.c.l.s4 1934713408
      %v327 = vunpack.c.0.s8 %v326
      %v328 = vperm.slane %v322, %v327
      %v330 = vunpack.c.l.s4 1934713408
      %v331 = vunpack.c.0.s8 %v330
      %v332 = vperm.slane %v324, %v331
      %v333 = vrot.slane %v296, 4
      %v334 = vsel %vm161, %v333, %v284
      %v335 = vrot.slane %v284, 4
      %v336 = vsel %vm161, %v296, %v335
      %v338 = vunpack.c.l.s4 1934713408
      %v339 = vunpack.c.0.s8 %v338
      %v340 = vperm.slane %v334, %v339
      %v342 = vunpack.c.l.s4 1934713408
      %v343 = vunpack.c.0.s8 %v342
      %v344 = vperm.slane %v336, %v343
      %v345 = vrot.slane %v316, 4
      %v346 = vsel %vm161, %v345, %v304
      %v347 = vrot.slane %v304, 4
      %v348 = vsel %vm161, %v316, %v347
      %v350 = vunpack.c.l.s4 1934713408
      %v351 = vunpack.c.0.s8 %v350
      %v352 = vperm.slane %v346, %v351
      %v354 = vunpack.c.l.s4 1934713408
      %v355 = vunpack.c.0.s8 %v354
      %v356 = vperm.slane %v348, %v355
      %v357 = vrot.slane %v320, 4
      %v358 = vsel %vm161, %v357, %v308
      %v359 = vrot.slane %v308, 4
      %v360 = vsel %vm161, %v320, %v359
      %v362 = vunpack.c.l.s4 1934713408
      %v363 = vunpack.c.0.s8 %v362
      %v364 = vperm.slane %v358, %v363
      %v366 = vunpack.c.l.s4 1934713408
      %v367 = vunpack.c.0.s8 %v366
      %v368 = vperm.slane %v360, %v367
      %v369 = vrot.slane %v352, 4
      %v370 = vsel %vm161, %v369, %v328
      %v371 = vrot.slane %v328, 4
      %v372 = vsel %vm161, %v352, %v371
      %v373 = vrot.slane %v356, 4
      %v374 = vsel %vm161, %v373, %v332
      %v375 = vrot.slane %v332, 4
      %v376 = vsel %vm161, %v356, %v375
      %v377 = vrot.slane %v364, 4
      %v378 = vsel %vm161, %v377, %v340
      %v379 = vrot.slane %v340, 4
      %v380 = vsel %vm161, %v364, %v379
      %v381 = vrot.slane %v368, 4
      %v382 = vsel %vm161, %v381, %v344
      %v383 = vrot.slane %v344, 4
      %v384 = vsel %vm161, %v368, %v383
      %386 = vrot.lane.b32.xlu0 %v260, 16
      %v387 = vpop.permute.xlu0 %386
      %390 = vrot.lane.b32.xlu0 %v262, 32
      %v391 = vpop.permute.xlu0 %390
      %394 = vrot.lane.b32.xlu0 %v264, 48
      %v395 = vpop.permute.xlu0 %394
      %398 = vrot.lane.b32.xlu0 %v266, 64
      %v399 = vpop.permute.xlu0 %398
      %402 = vrot.lane.b32.xlu0 %v268, 80
      %v403 = vpop.permute.xlu0 %402
      %406 = vrot.lane.b32.xlu0 %v270, 96
      %v407 = vpop.permute.xlu0 %406
      %410 = vrot.lane.b32.xlu0 %v272, 112
      %v411 = vpop.permute.xlu0 %410
      %414 = vrot.lane.b32.xlu0 %v372, 16
      %v415 = vpop.permute.xlu0 %414
      %418 = vrot.lane.b32.xlu0 %v374, 32
      %v419 = vpop.permute.xlu0 %418
      %422 = vrot.lane.b32.xlu0 %v376, 48
      %v423 = vpop.permute.xlu0 %422
      %426 = vrot.lane.b32.xlu0 %v378, 64
      %v427 = vpop.permute.xlu0 %426
      %430 = vrot.lane.b32.xlu0 %v380, 80
      %v431 = vpop.permute.xlu0 %430
      %434 = vrot.lane.b32.xlu0 %v382, 96
      %v435 = vpop.permute.xlu0 %434
      %438 = vrot.lane.b32.xlu0 %v384, 112
      %v439 = vpop.permute.xlu0 %438
      %vm441 = vcmask 130048
      %v442 = vsel %vm441, %v258, %v387
      %vm443 = vcmask 261120
      %v444 = vsel %vm443, %v442, %v391
      %vm445 = vcmask 392192
      %v446 = vsel %vm445, %v444, %v395
      %vm447 = vcmask 523264
      %v448 = vsel %vm447, %v446, %v399
      %vm449 = vcmask 654336
      %v450 = vsel %vm449, %v448, %v403
      %vm451 = vcmask 785408
      %v452 = vsel %vm451, %v450, %v407
      %vm453 = vcmask 916480
      %v454 = vsel %vm453, %v452, %v411
      %v455 = vsel %vm441, %v370, %v415
      %v456 = vsel %vm443, %v455, %v419
      %v457 = vsel %vm445, %v456, %v423
      %v458 = vsel %vm447, %v457, %v427
      %v459 = vsel %vm449, %v458, %v431
      %v460 = vsel %vm451, %v459, %v435
      %v461 = vsel %vm453, %v460, %v439
      %478 = vrot.lane.b32.xlu0 %v144, 127
      %v479 = vpop.permute.xlu0 %478
      %480 = vrot.lane.b32.xlu0 %v145, 127
      %v481 = vpop.permute.xlu0 %480
      %482 = vrot.lane.b32.xlu0 %v146, 127
      %v483 = vpop.permute.xlu0 %482
      %484 = vrot.lane.b32.xlu0 %v147, 127
      %v485 = vpop.permute.xlu0 %484
      %486 = vrot.lane.b32.xlu0 %v148, 127
      %v487 = vpop.permute.xlu0 %486
      %488 = vrot.lane.b32.xlu0 %v149, 127
      %v489 = vpop.permute.xlu0 %488
      %490 = vrot.lane.b32.xlu0 %v150, 127
      %v491 = vpop.permute.xlu0 %490
      %492 = vrot.lane.b32.xlu0 %v151, 127
      %v493 = vpop.permute.xlu0 %492
      %494 = vrot.lane.b32.xlu0 %v152, 127
      %v495 = vpop.permute.xlu0 %494
      %496 = vrot.lane.b32.xlu0 %v153, 127
      %v497 = vpop.permute.xlu0 %496
      %498 = vrot.lane.b32.xlu0 %v154, 127
      %v499 = vpop.permute.xlu0 %498
      %500 = vrot.lane.b32.xlu0 %v155, 127
      %v501 = vpop.permute.xlu0 %500
      %502 = vrot.lane.b32.xlu0 %v156, 127
      %v503 = vpop.permute.xlu0 %502
      %504 = vrot.lane.b32.xlu0 %v157, 127
      %v505 = vpop.permute.xlu0 %504
      %506 = vrot.lane.b32.xlu0 %v158, 127
      %v507 = vpop.permute.xlu0 %506
      %508 = vrot.lane.b32.xlu0 %v159, 127
      %v509 = vpop.permute.xlu0 %508
      %v526 = vrot.slane %v487, 4
      %v527 = vsel %vm161, %v526, %v479
      %v528 = vrot.slane %v479, 4
      %v529 = vsel %vm161, %v487, %v528
      %v531 = vunpack.c.l.s4 1983009808
      %v532 = vunpack.c.0.s8 %v531
      %v533 = vperm.slane %v527, %v532
      %v535 = vunpack.c.l.s4 1983009808
      %v536 = vunpack.c.0.s8 %v535
      %v537 = vperm.slane %v529, %v536
      %v538 = vrot.slane %v491, 4
      %v539 = vsel %vm161, %v538, %v483
      %v540 = vrot.slane %v483, 4
      %v541 = vsel %vm161, %v491, %v540
      %v543 = vunpack.c.l.s4 1983009808
      %v544 = vunpack.c.0.s8 %v543
      %v545 = vperm.slane %v539, %v544
      %v547 = vunpack.c.l.s4 1983009808
      %v548 = vunpack.c.0.s8 %v547
      %v549 = vperm.slane %v541, %v548
      %v550 = vrot.slane %v503, 4
      %v551 = vsel %vm161, %v550, %v495
      %v552 = vrot.slane %v495, 4
      %v553 = vsel %vm161, %v503, %v552
      %v555 = vunpack.c.l.s4 1983009808
      %v556 = vunpack.c.0.s8 %v555
      %v557 = vperm.slane %v551, %v556
      %v559 = vunpack.c.l.s4 1983009808
      %v560 = vunpack.c.0.s8 %v559
      %v561 = vperm.slane %v553, %v560
      %v562 = vrot.slane %v507, 4
      %v563 = vsel %vm161, %v562, %v499
      %v564 = vrot.slane %v499, 4
      %v565 = vsel %vm161, %v507, %v564
      %v567 = vunpack.c.l.s4 1983009808
      %v568 = vunpack.c.0.s8 %v567
      %v569 = vperm.slane %v563, %v568
      %v571 = vunpack.c.l.s4 1983009808
      %v572 = vunpack.c.0.s8 %v571
      %v573 = vperm.slane %v565, %v572
      %v574 = vrot.slane %v545, 4
      %v575 = vsel %vm161, %v574, %v533
      %v576 = vrot.slane %v533, 4
      %v577 = vsel %vm161, %v545, %v576
      %v579 = vunpack.c.l.s4 1934713408
      %v580 = vunpack.c.0.s8 %v579
      %v581 = vperm.slane %v575, %v580
      %v583 = vunpack.c.l.s4 1934713408
      %v584 = vunpack.c.0.s8 %v583
      %v585 = vperm.slane %v577, %v584
      %v586 = vrot.slane %v549, 4
      %v587 = vsel %vm161, %v586, %v537
      %v588 = vrot.slane %v537, 4
      %v589 = vsel %vm161, %v549, %v588
      %v591 = vunpack.c.l.s4 1934713408
      %v592 = vunpack.c.0.s8 %v591
      %v593 = vperm.slane %v587, %v592
      %v595 = vunpack.c.l.s4 1934713408
      %v596 = vunpack.c.0.s8 %v595
      %v597 = vperm.slane %v589, %v596
      %v598 = vrot.slane %v569, 4
      %v599 = vsel %vm161, %v598, %v557
      %v600 = vrot.slane %v557, 4
      %v601 = vsel %vm161, %v569, %v600
      %v603 = vunpack.c.l.s4 1934713408
      %v604 = vunpack.c.0.s8 %v603
      %v605 = vperm.slane %v599, %v604
      %v607 = vunpack.c.l.s4 1934713408
      %v608 = vunpack.c.0.s8 %v607
      %v609 = vperm.slane %v601, %v608
      %v610 = vrot.slane %v573, 4
      %v611 = vsel %vm161, %v610, %v561
      %v612 = vrot.slane %v561, 4
      %v613 = vsel %vm161, %v573, %v612
      %v615 = vunpack.c.l.s4 1934713408
      %v616 = vunpack.c.0.s8 %v615
      %v617 = vperm.slane %v611, %v616
      %v619 = vunpack.c.l.s4 1934713408
      %v620 = vunpack.c.0.s8 %v619
      %v621 = vperm.slane %v613, %v620
      %v622 = vrot.slane %v605, 4
      %v623 = vsel %vm161, %v622, %v581
      %v624 = vrot.slane %v581, 4
      %v625 = vsel %vm161, %v605, %v624
      %v626 = vrot.slane %v609, 4
      %v627 = vsel %vm161, %v626, %v585
      %v628 = vrot.slane %v585, 4
      %v629 = vsel %vm161, %v609, %v628
      %v630 = vrot.slane %v617, 4
      %v631 = vsel %vm161, %v630, %v593
      %v632 = vrot.slane %v593, 4
      %v633 = vsel %vm161, %v617, %v632
      %v634 = vrot.slane %v621, 4
      %v635 = vsel %vm161, %v634, %v597
      %v636 = vrot.slane %v597, 4
      %v637 = vsel %vm161, %v621, %v636
      %v638 = vrot.slane %v489, 4
      %v639 = vsel %vm161, %v638, %v481
      %v640 = vrot.slane %v481, 4
      %v641 = vsel %vm161, %v489, %v640
      %v643 = vunpack.c.l.s4 1983009808
      %v644 = vunpack.c.0.s8 %v643
      %v645 = vperm.slane %v639, %v644
      %v647 = vunpack.c.l.s4 1983009808
      %v648 = vunpack.c.0.s8 %v647
      %v649 = vperm.slane %v641, %v648
      %v650 = vrot.slane %v493, 4
      %v651 = vsel %vm161, %v650, %v485
      %v652 = vrot.slane %v485, 4
      %v653 = vsel %vm161, %v493, %v652
      %v655 = vunpack.c.l.s4 1983009808
      %v656 = vunpack.c.0.s8 %v655
      %v657 = vperm.slane %v651, %v656
      %v659 = vunpack.c.l.s4 1983009808
      %v660 = vunpack.c.0.s8 %v659
      %v661 = vperm.slane %v653, %v660
      %v662 = vrot.slane %v505, 4
      %v663 = vsel %vm161, %v662, %v497
      %v664 = vrot.slane %v497, 4
      %v665 = vsel %vm161, %v505, %v664
      %v667 = vunpack.c.l.s4 1983009808
      %v668 = vunpack.c.0.s8 %v667
      %v669 = vperm.slane %v663, %v668
      %v671 = vunpack.c.l.s4 1983009808
      %v672 = vunpack.c.0.s8 %v671
      %v673 = vperm.slane %v665, %v672
      %v674 = vrot.slane %v509, 4
      %v675 = vsel %vm161, %v674, %v501
      %v676 = vrot.slane %v501, 4
      %v677 = vsel %vm161, %v509, %v676
      %v679 = vunpack.c.l.s4 1983009808
      %v680 = vunpack.c.0.s8 %v679
      %v681 = vperm.slane %v675, %v680
      %v683 = vunpack.c.l.s4 1983009808
      %v684 = vunpack.c.0.s8 %v683
      %v685 = vperm.slane %v677, %v684
      %v686 = vrot.slane %v657, 4
      %v687 = vsel %vm161, %v686, %v645
      %v688 = vrot.slane %v645, 4
      %v689 = vsel %vm161, %v657, %v688
      %v691 = vunpack.c.l.s4 1934713408
      %v692 = vunpack.c.0.s8 %v691
      %v693 = vperm.slane %v687, %v692
      %v695 = vunpack.c.l.s4 1934713408
      %v696 = vunpack.c.0.s8 %v695
      %v697 = vperm.slane %v689, %v696
      %v698 = vrot.slane %v661, 4
      %v699 = vsel %vm161, %v698, %v649
      %v700 = vrot.slane %v649, 4
      %v701 = vsel %vm161, %v661, %v700
      %v703 = vunpack.c.l.s4 1934713408
      %v704 = vunpack.c.0.s8 %v703
      %v705 = vperm.slane %v699, %v704
      %v707 = vunpack.c.l.s4 1934713408
      %v708 = vunpack.c.0.s8 %v707
      %v709 = vperm.slane %v701, %v708
      %v710 = vrot.slane %v681, 4
      %v711 = vsel %vm161, %v710, %v669
      %v712 = vrot.slane %v669, 4
      %v713 = vsel %vm161, %v681, %v712
      %v715 = vunpack.c.l.s4 1934713408
      %v716 = vunpack.c.0.s8 %v715
      %v717 = vperm.slane %v711, %v716
      %v719 = vunpack.c.l.s4 1934713408
      %v720 = vunpack.c.0.s8 %v719
      %v721 = vperm.slane %v713, %v720
      %v722 = vrot.slane %v685, 4
      %v723 = vsel %vm161, %v722, %v673
      %v724 = vrot.slane %v673, 4
      %v725 = vsel %vm161, %v685, %v724
      %v727 = vunpack.c.l.s4 1934713408
      %v728 = vunpack.c.0.s8 %v727
      %v729 = vperm.slane %v723, %v728
      %v731 = vunpack.c.l.s4 1934713408
      %v732 = vunpack.c.0.s8 %v731
      %v733 = vperm.slane %v725, %v732
      %v734 = vrot.slane %v717, 4
      %v735 = vsel %vm161, %v734, %v693
      %v736 = vrot.slane %v693, 4
      %v737 = vsel %vm161, %v717, %v736
      %v738 = vrot.slane %v721, 4
      %v739 = vsel %vm161, %v738, %v697
      %v740 = vrot.slane %v697, 4
      %v741 = vsel %vm161, %v721, %v740
      %v742 = vrot.slane %v729, 4
      %v743 = vsel %vm161, %v742, %v705
      %v744 = vrot.slane %v705, 4
      %v745 = vsel %vm161, %v729, %v744
      %v746 = vrot.slane %v733, 4
      %v747 = vsel %vm161, %v746, %v709
      %v748 = vrot.slane %v709, 4
      %v749 = vsel %vm161, %v733, %v748
      %751 = vrot.lane.b32.xlu0 %v625, 16
      %v752 = vpop.permute.xlu0 %751
      %755 = vrot.lane.b32.xlu0 %v627, 32
      %v756 = vpop.permute.xlu0 %755
      %759 = vrot.lane.b32.xlu0 %v629, 48
      %v760 = vpop.permute.xlu0 %759
      %763 = vrot.lane.b32.xlu0 %v631, 64
      %v764 = vpop.permute.xlu0 %763
      %767 = vrot.lane.b32.xlu0 %v633, 80
      %v768 = vpop.permute.xlu0 %767
      %771 = vrot.lane.b32.xlu0 %v635, 96
      %v772 = vpop.permute.xlu0 %771
      %775 = vrot.lane.b32.xlu0 %v637, 112
      %v776 = vpop.permute.xlu0 %775
      %779 = vrot.lane.b32.xlu0 %v737, 16
      %v780 = vpop.permute.xlu0 %779
      %783 = vrot.lane.b32.xlu0 %v739, 32
      %v784 = vpop.permute.xlu0 %783
      %787 = vrot.lane.b32.xlu0 %v741, 48
      %v788 = vpop.permute.xlu0 %787
      %791 = vrot.lane.b32.xlu0 %v743, 64
      %v792 = vpop.permute.xlu0 %791
      %795 = vrot.lane.b32.xlu0 %v745, 80
      %v796 = vpop.permute.xlu0 %795
      %799 = vrot.lane.b32.xlu0 %v747, 96
      %v800 = vpop.permute.xlu0 %799
      %803 = vrot.lane.b32.xlu0 %v749, 112
      %v804 = vpop.permute.xlu0 %803
      %v806 = vsel %vm441, %v623, %v752
      %v807 = vsel %vm443, %v806, %v756
      %v808 = vsel %vm445, %v807, %v760
      %v809 = vsel %vm447, %v808, %v764
      %v810 = vsel %vm449, %v809, %v768
      %v811 = vsel %vm451, %v810, %v772
      %v812 = vsel %vm453, %v811, %v776
      %v813 = vsel %vm441, %v735, %v780
      %v814 = vsel %vm443, %v813, %v784
      %v815 = vsel %vm445, %v814, %v788
      %v816 = vsel %vm447, %v815, %v792
      %v817 = vsel %vm449, %v816, %v796
      %v818 = vsel %vm451, %v817, %v800
      %v819 = vsel %vm453, %v818, %v804
      %820 = vrot.lane.b32.xlu0 %v144, 126
      %v821 = vpop.permute.xlu0 %820
      %822 = vrot.lane.b32.xlu0 %v145, 126
      %v823 = vpop.permute.xlu0 %822
      %824 = vrot.lane.b32.xlu0 %v146, 126
      %v825 = vpop.permute.xlu0 %824
      %826 = vrot.lane.b32.xlu0 %v147, 126
      %v827 = vpop.permute.xlu0 %826
      %828 = vrot.lane.b32.xlu0 %v148, 126
      %v829 = vpop.permute.xlu0 %828
      %830 = vrot.lane.b32.xlu0 %v149, 126
      %v831 = vpop.permute.xlu0 %830
      %832 = vrot.lane.b32.xlu0 %v150, 126
      %v833 = vpop.permute.xlu0 %832
      %834 = vrot.lane.b32.xlu0 %v151, 126
      %v835 = vpop.permute.xlu0 %834
      %836 = vrot.lane.b32.xlu0 %v152, 126
      %v837 = vpop.permute.xlu0 %836
      %838 = vrot.lane.b32.xlu0 %v153, 126
      %v839 = vpop.permute.xlu0 %838
      %840 = vrot.lane.b32.xlu0 %v154, 126
      %v841 = vpop.permute.xlu0 %840
      %842 = vrot.lane.b32.xlu0 %v155, 126
      %v843 = vpop.permute.xlu0 %842
      %844 = vrot.lane.b32.xlu0 %v156, 126
      %v845 = vpop.permute.xlu0 %844
      %846 = vrot.lane.b32.xlu0 %v157, 126
      %v847 = vpop.permute.xlu0 %846
      %848 = vrot.lane.b32.xlu0 %v158, 126
      %v849 = vpop.permute.xlu0 %848
      %850 = vrot.lane.b32.xlu0 %v159, 126
      %v851 = vpop.permute.xlu0 %850
      %v868 = vrot.slane %v829, 4
      %v869 = vsel %vm161, %v868, %v821
      %v870 = vrot.slane %v821, 4
      %v871 = vsel %vm161, %v829, %v870
      %v873 = vunpack.c.l.s4 1983009808
      %v874 = vunpack.c.0.s8 %v873
      %v875 = vperm.slane %v869, %v874
      %v877 = vunpack.c.l.s4 1983009808
      %v878 = vunpack.c.0.s8 %v877
      %v879 = vperm.slane %v871, %v878
      %v880 = vrot.slane %v833, 4
      %v881 = vsel %vm161, %v880, %v825
      %v882 = vrot.slane %v825, 4
      %v883 = vsel %vm161, %v833, %v882
      %v885 = vunpack.c.l.s4 1983009808
      %v886 = vunpack.c.0.s8 %v885
      %v887 = vperm.slane %v881, %v886
      %v889 = vunpack.c.l.s4 1983009808
      %v890 = vunpack.c.0.s8 %v889
      %v891 = vperm.slane %v883, %v890
      %v892 = vrot.slane %v845, 4
      %v893 = vsel %vm161, %v892, %v837
      %v894 = vrot.slane %v837, 4
      %v895 = vsel %vm161, %v845, %v894
      %v897 = vunpack.c.l.s4 1983009808
      %v898 = vunpack.c.0.s8 %v897
      %v899 = vperm.slane %v893, %v898
      %v901 = vunpack.c.l.s4 1983009808
      %v902 = vunpack.c.0.s8 %v901
      %v903 = vperm.slane %v895, %v902
      %v904 = vrot.slane %v849, 4
      %v905 = vsel %vm161, %v904, %v841
      %v906 = vrot.slane %v841, 4
      %v907 = vsel %vm161, %v849, %v906
      %v909 = vunpack.c.l.s4 1983009808
      %v910 = vunpack.c.0.s8 %v909
      %v911 = vperm.slane %v905, %v910
      %v913 = vunpack.c.l.s4 1983009808
      %v914 = vunpack.c.0.s8 %v913
      %v915 = vperm.slane %v907, %v914
      %v916 = vrot.slane %v887, 4
      %v917 = vsel %vm161, %v916, %v875
      %v918 = vrot.slane %v875, 4
      %v919 = vsel %vm161, %v887, %v918
      %v921 = vunpack.c.l.s4 1934713408
      %v922 = vunpack.c.0.s8 %v921
      %v923 = vperm.slane %v917, %v922
      %v925 = vunpack.c.l.s4 1934713408
      %v926 = vunpack.c.0.s8 %v925
      %v927 = vperm.slane %v919, %v926
      %v928 = vrot.slane %v891, 4
      %v929 = vsel %vm161, %v928, %v879
      %v930 = vrot.slane %v879, 4
      %v931 = vsel %vm161, %v891, %v930
      %v933 = vunpack.c.l.s4 1934713408
      %v934 = vunpack.c.0.s8 %v933
      %v935 = vperm.slane %v929, %v934
      %v937 = vunpack.c.l.s4 1934713408
      %v938 = vunpack.c.0.s8 %v937
      %v939 = vperm.slane %v931, %v938
      %v940 = vrot.slane %v911, 4
      %v941 = vsel %vm161, %v940, %v899
      %v942 = vrot.slane %v899, 4
      %v943 = vsel %vm161, %v911, %v942
      %v945 = vunpack.c.l.s4 1934713408
      %v946 = vunpack.c.0.s8 %v945
      %v947 = vperm.slane %v941, %v946
      %v949 = vunpack.c.l.s4 1934713408
      %v950 = vunpack.c.0.s8 %v949
      %v951 = vperm.slane %v943, %v950
      %v952 = vrot.slane %v915, 4
      %v953 = vsel %vm161, %v952, %v903
      %v954 = vrot.slane %v903, 4
      %v955 = vsel %vm161, %v915, %v954
      %v957 = vunpack.c.l.s4 1934713408
      %v958 = vunpack.c.0.s8 %v957
      %v959 = vperm.slane %v953, %v958
      %v961 = vunpack.c.l.s4 1934713408
      %v962 = vunpack.c.0.s8 %v961
      %v963 = vperm.slane %v955, %v962
      %v964 = vrot.slane %v947, 4
      %v965 = vsel %vm161, %v964, %v923
      %v966 = vrot.slane %v923, 4
      %v967 = vsel %vm161, %v947, %v966
      %v968 = vrot.slane %v951, 4
      %v969 = vsel %vm161, %v968, %v927
      %v970 = vrot.slane %v927, 4
      %v971 = vsel %vm161, %v951, %v970
      %v972 = vrot.slane %v959, 4
      %v973 = vsel %vm161, %v972, %v935
      %v974 = vrot.slane %v935, 4
      %v975 = vsel %vm161, %v959, %v974
      %v976 = vrot.slane %v963, 4
      %v977 = vsel %vm161, %v976, %v939
      %v978 = vrot.slane %v939, 4
      %v979 = vsel %vm161, %v963, %v978
      %v980 = vrot.slane %v831, 4
      %v981 = vsel %vm161, %v980, %v823
      %v982 = vrot.slane %v823, 4
      %v983 = vsel %vm161, %v831, %v982
      %v985 = vunpack.c.l.s4 1983009808
      %v986 = vunpack.c.0.s8 %v985
      %v987 = vperm.slane %v981, %v986
      %v989 = vunpack.c.l.s4 1983009808
      %v990 = vunpack.c.0.s8 %v989
      %v991 = vperm.slane %v983, %v990
      %v992 = vrot.slane %v835, 4
      %v993 = vsel %vm161, %v992, %v827
      %v994 = vrot.slane %v827, 4
      %v995 = vsel %vm161, %v835, %v994
      %v997 = vunpack.c.l.s4 1983009808
      %v998 = vunpack.c.0.s8 %v997
      %v999 = vperm.slane %v993, %v998
      %v1001 = vunpack.c.l.s4 1983009808
      %v1002 = vunpack.c.0.s8 %v1001
      %v1003 = vperm.slane %v995, %v1002
      %v1004 = vrot.slane %v847, 4
      %v1005 = vsel %vm161, %v1004, %v839
      %v1006 = vrot.slane %v839, 4
      %v1007 = vsel %vm161, %v847, %v1006
      %v1009 = vunpack.c.l.s4 1983009808
      %v1010 = vunpack.c.0.s8 %v1009
      %v1011 = vperm.slane %v1005, %v1010
      %v1013 = vunpack.c.l.s4 1983009808
      %v1014 = vunpack.c.0.s8 %v1013
      %v1015 = vperm.slane %v1007, %v1014
      %v1016 = vrot.slane %v851, 4
      %v1017 = vsel %vm161, %v1016, %v843
      %v1018 = vrot.slane %v843, 4
      %v1019 = vsel %vm161, %v851, %v1018
      %v1021 = vunpack.c.l.s4 1983009808
      %v1022 = vunpack.c.0.s8 %v1021
      %v1023 = vperm.slane %v1017, %v1022
      %v1025 = vunpack.c.l.s4 1983009808
      %v1026 = vunpack.c.0.s8 %v1025
      %v1027 = vperm.slane %v1019, %v1026
      %v1028 = vrot.slane %v999, 4
      %v1029 = vsel %vm161, %v1028, %v987
      %v1030 = vrot.slane %v987, 4
      %v1031 = vsel %vm161, %v999, %v1030
      %v1033 = vunpack.c.l.s4 1934713408
      %v1034 = vunpack.c.0.s8 %v1033
      %v1035 = vperm.slane %v1029, %v1034
      %v1037 = vunpack.c.l.s4 1934713408
      %v1038 = vunpack.c.0.s8 %v1037
      %v1039 = vperm.slane %v1031, %v1038
      %v1040 = vrot.slane %v1003, 4
      %v1041 = vsel %vm161, %v1040, %v991
      %v1042 = vrot.slane %v991, 4
      %v1043 = vsel %vm161, %v1003, %v1042
      %v1045 = vunpack.c.l.s4 1934713408
      %v1046 = vunpack.c.0.s8 %v1045
      %v1047 = vperm.slane %v1041, %v1046
      %v1049 = vunpack.c.l.s4 1934713408
      %v1050 = vunpack.c.0.s8 %v1049
      %v1051 = vperm.slane %v1043, %v1050
      %v1052 = vrot.slane %v1023, 4
      %v1053 = vsel %vm161, %v1052, %v1011
      %v1054 = vrot.slane %v1011, 4
      %v1055 = vsel %vm161, %v1023, %v1054
      %v1057 = vunpack.c.l.s4 1934713408
      %v1058 = vunpack.c.0.s8 %v1057
      %v1059 = vperm.slane %v1053, %v1058
      %v1061 = vunpack.c.l.s4 1934713408
      %v1062 = vunpack.c.0.s8 %v1061
      %v1063 = vperm.slane %v1055, %v1062
      %v1064 = vrot.slane %v1027, 4
      %v1065 = vsel %vm161, %v1064, %v1015
      %v1066 = vrot.slane %v1015, 4
      %v1067 = vsel %vm161, %v1027, %v1066
      %v1069 = vunpack.c.l.s4 1934713408
      %v1070 = vunpack.c.0.s8 %v1069
      %v1071 = vperm.slane %v1065, %v1070
      %v1073 = vunpack.c.l.s4 1934713408
      %v1074 = vunpack.c.0.s8 %v1073
      %v1075 = vperm.slane %v1067, %v1074
      %v1076 = vrot.slane %v1059, 4
      %v1077 = vsel %vm161, %v1076, %v1035
      %v1078 = vrot.slane %v1035, 4
      %v1079 = vsel %vm161, %v1059, %v1078
      %v1080 = vrot.slane %v1063, 4
      %v1081 = vsel %vm161, %v1080, %v1039
      %v1082 = vrot.slane %v1039, 4
      %v1083 = vsel %vm161, %v1063, %v1082
      %v1084 = vrot.slane %v1071, 4
      %v1085 = vsel %vm161, %v1084, %v1047
      %v1086 = vrot.slane %v1047, 4
      %v1087 = vsel %vm161, %v1071, %v1086
      %v1088 = vrot.slane %v1075, 4
      %v1089 = vsel %vm161, %v1088, %v1051
      %v1090 = vrot.slane %v1051, 4
      %v1091 = vsel %vm161, %v1075, %v1090
      %1093 = vrot.lane.b32.xlu0 %v967, 16
      %v1094 = vpop.permute.xlu0 %1093
      %1097 = vrot.lane.b32.xlu0 %v969, 32
      %v1098 = vpop.permute.xlu0 %1097
      %1101 = vrot.lane.b32.xlu0 %v971, 48
      %v1102 = vpop.permute.xlu0 %1101
      %1105 = vrot.lane.b32.xlu0 %v973, 64
      %v1106 = vpop.permute.xlu0 %1105
      %1109 = vrot.lane.b32.xlu0 %v975, 80
      %v1110 = vpop.permute.xlu0 %1109
      %1113 = vrot.lane.b32.xlu0 %v977, 96
      %v1114 = vpop.permute.xlu0 %1113
      %1117 = vrot.lane.b32.xlu0 %v979, 112
      %v1118 = vpop.permute.xlu0 %1117
      %1121 = vrot.lane.b32.xlu0 %v1079, 16
      %v1122 = vpop.permute.xlu0 %1121
      %1125 = vrot.lane.b32.xlu0 %v1081, 32
      %v1126 = vpop.permute.xlu0 %1125
      %1129 = vrot.lane.b32.xlu0 %v1083, 48
      %v1130 = vpop.permute.xlu0 %1129
      %1133 = vrot.lane.b32.xlu0 %v1085, 64
      %v1134 = vpop.permute.xlu0 %1133
      %1137 = vrot.lane.b32.xlu0 %v1087, 80
      %v1138 = vpop.permute.xlu0 %1137
      %1141 = vrot.lane.b32.xlu0 %v1089, 96
      %v1142 = vpop.permute.xlu0 %1141
      %1145 = vrot.lane.b32.xlu0 %v1091, 112
      %v1146 = vpop.permute.xlu0 %1145
      %v1148 = vsel %vm441, %v965, %v1094
      %v1149 = vsel %vm443, %v1148, %v1098
      %v1150 = vsel %vm445, %v1149, %v1102
      %v1151 = vsel %vm447, %v1150, %v1106
      %v1152 = vsel %vm449, %v1151, %v1110
      %v1153 = vsel %vm451, %v1152, %v1114
      %v1154 = vsel %vm453, %v1153, %v1118
      %v1155 = vsel %vm441, %v1077, %v1122
      %v1156 = vsel %vm443, %v1155, %v1126
      %v1157 = vsel %vm445, %v1156, %v1130
      %v1158 = vsel %vm447, %v1157, %v1134
      %v1159 = vsel %vm449, %v1158, %v1138
      %v1160 = vsel %vm451, %v1159, %v1142
      %v1161 = vsel %vm453, %v1160, %v1146
      %v1162 = vld [vmem:[%s138 + $0x1] sm:$0xff]
      %v1163 = vld [vmem:[%s138 + $0x9] sm:$0xff]
      %v1164 = vld [vmem:[%s138 + $0x19] sm:$0xff]
      %v1165 = vld [vmem:[%s138 + $0x21] sm:$0xff]
      %v1166 = vld [vmem:[%s138 + $0x31] sm:$0xff]
      %v1167 = vld [vmem:[%s138 + $0x39] sm:$0xff]
      %v1168 = vld [vmem:[%s138 + $0x49] sm:$0xff]
      %v1169 = vld [vmem:[%s138 + $0x51] sm:$0xff]
      %v1170 = vld [vmem:[%s138 + $0x61] sm:$0xff]
      %v1171 = vld [vmem:[%s138 + $0x69] sm:$0xff]
      %v1172 = vld [vmem:[%s138 + $0x79] sm:$0xff]
      %v1173 = vld [vmem:[%s138 + $0x81] sm:$0xff]
      %v1174 = vld [vmem:[%s138 + $0x91] sm:$0xff]
      %v1175 = vld [vmem:[%s138 + $0x99] sm:$0xff]
      %v1176 = vld [vmem:[%s138 + $0xa9] sm:$0xff]
      %v1177 = vld [vmem:[%s138 + $0xb1] sm:$0xff]
      %v1178 = vrot.slane %v1166, 4
      %v1179 = vsel %vm161, %v1178, %v1162
      %v1180 = vrot.slane %v1162, 4
      %v1181 = vsel %vm161, %v1166, %v1180
      %v1183 = vunpack.c.l.s4 1983009808
      %v1184 = vunpack.c.0.s8 %v1183
      %v1185 = vperm.slane %v1179, %v1184
      %v1187 = vunpack.c.l.s4 1983009808
      %v1188 = vunpack.c.0.s8 %v1187
      %v1189 = vperm.slane %v1181, %v1188
      %v1190 = vrot.slane %v1168, 4
      %v1191 = vsel %vm161, %v1190, %v1164
      %v1192 = vrot.slane %v1164, 4
      %v1193 = vsel %vm161, %v1168, %v1192
      %v1195 = vunpack.c.l.s4 1983009808
      %v1196 = vunpack.c.0.s8 %v1195
      %v1197 = vperm.slane %v1191, %v1196
      %v1199 = vunpack.c.l.s4 1983009808
      %v1200 = vunpack.c.0.s8 %v1199
      %v1201 = vperm.slane %v1193, %v1200
      %v1202 = vrot.slane %v1174, 4
      %v1203 = vsel %vm161, %v1202, %v1170
      %v1204 = vrot.slane %v1170, 4
      %v1205 = vsel %vm161, %v1174, %v1204
      %v1207 = vunpack.c.l.s4 1983009808
      %v1208 = vunpack.c.0.s8 %v1207
      %v1209 = vperm.slane %v1203, %v1208
      %v1211 = vunpack.c.l.s4 1983009808
      %v1212 = vunpack.c.0.s8 %v1211
      %v1213 = vperm.slane %v1205, %v1212
      %v1214 = vrot.slane %v1176, 4
      %v1215 = vsel %vm161, %v1214, %v1172
      %v1216 = vrot.slane %v1172, 4
      %v1217 = vsel %vm161, %v1176, %v1216
      %v1219 = vunpack.c.l.s4 1983009808
      %v1220 = vunpack.c.0.s8 %v1219
      %v1221 = vperm.slane %v1215, %v1220
      %v1223 = vunpack.c.l.s4 1983009808
      %v1224 = vunpack.c.0.s8 %v1223
      %v1225 = vperm.slane %v1217, %v1224
      %v1226 = vrot.slane %v1197, 4
      %v1227 = vsel %vm161, %v1226, %v1185
      %v1228 = vrot.slane %v1185, 4
      %v1229 = vsel %vm161, %v1197, %v1228
      %v1231 = vunpack.c.l.s4 1934713408
      %v1232 = vunpack.c.0.s8 %v1231
      %v1233 = vperm.slane %v1227, %v1232
      %v1235 = vunpack.c.l.s4 1934713408
      %v1236 = vunpack.c.0.s8 %v1235
      %v1237 = vperm.slane %v1229, %v1236
      %v1238 = vrot.slane %v1201, 4
      %v1239 = vsel %vm161, %v1238, %v1189
      %v1240 = vrot.slane %v1189, 4
      %v1241 = vsel %vm161, %v1201, %v1240
      %v1243 = vunpack.c.l.s4 1934713408
      %v1244 = vunpack.c.0.s8 %v1243
      %v1245 = vperm.slane %v1239, %v1244
      %v1247 = vunpack.c.l.s4 1934713408
      %v1248 = vunpack.c.0.s8 %v1247
      %v1249 = vperm.slane %v1241, %v1248
      %v1250 = vrot.slane %v1221, 4
      %v1251 = vsel %vm161, %v1250, %v1209
      %v1252 = vrot.slane %v1209, 4
      %v1253 = vsel %vm161, %v1221, %v1252
      %v1255 = vunpack.c.l.s4 1934713408
      %v1256 = vunpack.c.0.s8 %v1255
      %v1257 = vperm.slane %v1251, %v1256
      %v1259 = vunpack.c.l.s4 1934713408
      %v1260 = vunpack.c.0.s8 %v1259
      %v1261 = vperm.slane %v1253, %v1260
      %v1262 = vrot.slane %v1225, 4
      %v1263 = vsel %vm161, %v1262, %v1213
      %v1264 = vrot.slane %v1213, 4
      %v1265 = vsel %vm161, %v1225, %v1264
      %v1267 = vunpack.c.l.s4 1934713408
      %v1268 = vunpack.c.0.s8 %v1267
      %v1269 = vperm.slane %v1263, %v1268
      %v1271 = vunpack.c.l.s4 1934713408
      %v1272 = vunpack.c.0.s8 %v1271
      %v1273 = vperm.slane %v1265, %v1272
      %v1274 = vrot.slane %v1257, 4
      %v1275 = vsel %vm161, %v1274, %v1233
      %v1276 = vrot.slane %v1233, 4
      %v1277 = vsel %vm161, %v1257, %v1276
      %v1278 = vrot.slane %v1261, 4
      %v1279 = vsel %vm161, %v1278, %v1237
      %v1280 = vrot.slane %v1237, 4
      %v1281 = vsel %vm161, %v1261, %v1280
      %v1282 = vrot.slane %v1269, 4
      %v1283 = vsel %vm161, %v1282, %v1245
      %v1284 = vrot.slane %v1245, 4
      %v1285 = vsel %vm161, %v1269, %v1284
      %v1286 = vrot.slane %v1273, 4
      %v1287 = vsel %vm161, %v1286, %v1249
      %v1288 = vrot.slane %v1249, 4
      %v1289 = vsel %vm161, %v1273, %v1288
      %v1290 = vrot.slane %v1167, 4
      %v1291 = vsel %vm161, %v1290, %v1163
      %v1292 = vrot.slane %v1163, 4
      %v1293 = vsel %vm161, %v1167, %v1292
      %v1295 = vunpack.c.l.s4 1983009808
      %v1296 = vunpack.c.0.s8 %v1295
      %v1297 = vperm.slane %v1291, %v1296
      %v1299 = vunpack.c.l.s4 1983009808
      %v1300 = vunpack.c.0.s8 %v1299
      %v1301 = vperm.slane %v1293, %v1300
      %v1302 = vrot.slane %v1169, 4
      %v1303 = vsel %vm161, %v1302, %v1165
      %v1304 = vrot.slane %v1165, 4
      %v1305 = vsel %vm161, %v1169, %v1304
      %v1307 = vunpack.c.l.s4 1983009808
      %v1308 = vunpack.c.0.s8 %v1307
      %v1309 = vperm.slane %v1303, %v1308
      %v1311 = vunpack.c.l.s4 1983009808
      %v1312 = vunpack.c.0.s8 %v1311
      %v1313 = vperm.slane %v1305, %v1312
      %v1314 = vrot.slane %v1175, 4
      %v1315 = vsel %vm161, %v1314, %v1171
      %v1316 = vrot.slane %v1171, 4
      %v1317 = vsel %vm161, %v1175, %v1316
      %v1319 = vunpack.c.l.s4 1983009808
      %v1320 = vunpack.c.0.s8 %v1319
      %v1321 = vperm.slane %v1315, %v1320
      %v1323 = vunpack.c.l.s4 1983009808
      %v1324 = vunpack.c.0.s8 %v1323
      %v1325 = vperm.slane %v1317, %v1324
      %v1326 = vrot.slane %v1177, 4
      %v1327 = vsel %vm161, %v1326, %v1173
      %v1328 = vrot.slane %v1173, 4
      %v1329 = vsel %vm161, %v1177, %v1328
      %v1331 = vunpack.c.l.s4 1983009808
      %v1332 = vunpack.c.0.s8 %v1331
      %v1333 = vperm.slane %v1327, %v1332
      %v1335 = vunpack.c.l.s4 1983009808
      %v1336 = vunpack.c.0.s8 %v1335
      %v1337 = vperm.slane %v1329, %v1336
      %v1338 = vrot.slane %v1309, 4
      %v1339 = vsel %vm161, %v1338, %v1297
      %v1340 = vrot.slane %v1297, 4
      %v1341 = vsel %vm161, %v1309, %v1340
      %v1343 = vunpack.c.l.s4 1934713408
      %v1344 = vunpack.c.0.s8 %v1343
      %v1345 = vperm.slane %v1339, %v1344
      %v1347 = vunpack.c.l.s4 1934713408
      %v1348 = vunpack.c.0.s8 %v1347
      %v1349 = vperm.slane %v1341, %v1348
      %v1350 = vrot.slane %v1313, 4
      %v1351 = vsel %vm161, %v1350, %v1301
      %v1352 = vrot.slane %v1301, 4
      %v1353 = vsel %vm161, %v1313, %v1352
      %v1355 = vunpack.c.l.s4 1934713408
      %v1356 = vunpack.c.0.s8 %v1355
      %v1357 = vperm.slane %v1351, %v1356
      %v1359 = vunpack.c.l.s4 1934713408
      %v1360 = vunpack.c.0.s8 %v1359
      %v1361 = vperm.slane %v1353, %v1360
      %v1362 = vrot.slane %v1333, 4
      %v1363 = vsel %vm161, %v1362, %v1321
      %v1364 = vrot.slane %v1321, 4
      %v1365 = vsel %vm161, %v1333, %v1364
      %v1367 = vunpack.c.l.s4 1934713408
      %v1368 = vunpack.c.0.s8 %v1367
      %v1369 = vperm.slane %v1363, %v1368
      %v1371 = vunpack.c.l.s4 1934713408
      %v1372 = vunpack.c.0.s8 %v1371
      %v1373 = vperm.slane %v1365, %v1372
      %v1374 = vrot.slane %v1337, 4
      %v1375 = vsel %vm161, %v1374, %v1325
      %v1376 = vrot.slane %v1325, 4
      %v1377 = vsel %vm161, %v1337, %v1376
      %v1379 = vunpack.c.l.s4 1934713408
      %v1380 = vunpack.c.0.s8 %v1379
      %v1381 = vperm.slane %v1375, %v1380
      %v1383 = vunpack.c.l.s4 1934713408
      %v1384 = vunpack.c.0.s8 %v1383
      %v1385 = vperm.slane %v1377, %v1384
      %v1386 = vrot.slane %v1369, 4
      %v1387 = vsel %vm161, %v1386, %v1345
      %v1388 = vrot.slane %v1345, 4
      %v1389 = vsel %vm161, %v1369, %v1388
      %v1390 = vrot.slane %v1373, 4
      %v1391 = vsel %vm161, %v1390, %v1349
      %v1392 = vrot.slane %v1349, 4
      %v1393 = vsel %vm161, %v1373, %v1392
      %v1394 = vrot.slane %v1381, 4
      %v1395 = vsel %vm161, %v1394, %v1357
      %v1396 = vrot.slane %v1357, 4
      %v1397 = vsel %vm161, %v1381, %v1396
      %v1398 = vrot.slane %v1385, 4
      %v1399 = vsel %vm161, %v1398, %v1361
      %v1400 = vrot.slane %v1361, 4
      %v1401 = vsel %vm161, %v1385, %v1400
      %1403 = vrot.lane.b32.xlu0 %v1277, 16
      %v1404 = vpop.permute.xlu0 %1403
      %1407 = vrot.lane.b32.xlu0 %v1279, 32
      %v1408 = vpop.permute.xlu0 %1407
      %1411 = vrot.lane.b32.xlu0 %v1281, 48
      %v1412 = vpop.permute.xlu0 %1411
      %1415 = vrot.lane.b32.xlu0 %v1283, 64
      %v1416 = vpop.permute.xlu0 %1415
      %1419 = vrot.lane.b32.xlu0 %v1285, 80
      %v1420 = vpop.permute.xlu0 %1419
      %1423 = vrot.lane.b32.xlu0 %v1287, 96
      %v1424 = vpop.permute.xlu0 %1423
      %1427 = vrot.lane.b32.xlu0 %v1289, 112
      %v1428 = vpop.permute.xlu0 %1427
      %1431 = vrot.lane.b32.xlu0 %v1389, 16
      %v1432 = vpop.permute.xlu0 %1431
      %1435 = vrot.lane.b32.xlu0 %v1391, 32
      %v1436 = vpop.permute.xlu0 %1435
      %1439 = vrot.lane.b32.xlu0 %v1393, 48
      %v1440 = vpop.permute.xlu0 %1439
      %1443 = vrot.lane.b32.xlu0 %v1395, 64
      %v1444 = vpop.permute.xlu0 %1443
      %1447 = vrot.lane.b32.xlu0 %v1397, 80
      %v1448 = vpop.permute.xlu0 %1447
      %1451 = vrot.lane.b32.xlu0 %v1399, 96
      %v1452 = vpop.permute.xlu0 %1451
      %1455 = vrot.lane.b32.xlu0 %v1401, 112
      %v1456 = vpop.permute.xlu0 %1455
      %v1458 = vsel %vm441, %v1275, %v1404
      %v1459 = vsel %vm443, %v1458, %v1408
      %v1460 = vsel %vm445, %v1459, %v1412
      %v1461 = vsel %vm447, %v1460, %v1416
      %v1462 = vsel %vm449, %v1461, %v1420
      %v1463 = vsel %vm451, %v1462, %v1424
      %v1464 = vsel %vm453, %v1463, %v1428
      %v1465 = vsel %vm441, %v1387, %v1432
      %v1466 = vsel %vm443, %v1465, %v1436
      %v1467 = vsel %vm445, %v1466, %v1440
      %v1468 = vsel %vm447, %v1467, %v1444
      %v1469 = vsel %vm449, %v1468, %v1448
      %v1470 = vsel %vm451, %v1469, %v1452
      %v1471 = vsel %vm453, %v1470, %v1456
      %1488 = vrot.lane.b32.xlu0 %v1162, 127
      %v1489 = vpop.permute.xlu0 %1488
      %1490 = vrot.lane.b32.xlu0 %v1163, 127
      %v1491 = vpop.permute.xlu0 %1490
      %1492 = vrot.lane.b32.xlu0 %v1164, 127
      %v1493 = vpop.permute.xlu0 %1492
      %1494 = vrot.lane.b32.xlu0 %v1165, 127
      %v1495 = vpop.permute.xlu0 %1494
      %1496 = vrot.lane.b32.xlu0 %v1166, 127
      %v1497 = vpop.permute.xlu0 %1496
      %1498 = vrot.lane.b32.xlu0 %v1167, 127
      %v1499 = vpop.permute.xlu0 %1498
      %1500 = vrot.lane.b32.xlu0 %v1168, 127
      %v1501 = vpop.permute.xlu0 %1500
      %1502 = vrot.lane.b32.xlu0 %v1169, 127
      %v1503 = vpop.permute.xlu0 %1502
      %1504 = vrot.lane.b32.xlu0 %v1170, 127
      %v1505 = vpop.permute.xlu0 %1504
      %1506 = vrot.lane.b32.xlu0 %v1171, 127
      %v1507 = vpop.permute.xlu0 %1506
      %1508 = vrot.lane.b32.xlu0 %v1172, 127
      %v1509 = vpop.permute.xlu0 %1508
      %1510 = vrot.lane.b32.xlu0 %v1173, 127
      %v1511 = vpop.permute.xlu0 %1510
      %1512 = vrot.lane.b32.xlu0 %v1174, 127
      %v1513 = vpop.permute.xlu0 %1512
      %1514 = vrot.lane.b32.xlu0 %v1175, 127
      %v1515 = vpop.permute.xlu0 %1514
      %1516 = vrot.lane.b32.xlu0 %v1176, 127
      %v1517 = vpop.permute.xlu0 %1516
      %1518 = vrot.lane.b32.xlu0 %v1177, 127
      %v1519 = vpop.permute.xlu0 %1518
      %v1536 = vrot.slane %v1497, 4
      %v1537 = vsel %vm161, %v1536, %v1489
      %v1538 = vrot.slane %v1489, 4
      %v1539 = vsel %vm161, %v1497, %v1538
      %v1541 = vunpack.c.l.s4 1983009808
      %v1542 = vunpack.c.0.s8 %v1541
      %v1543 = vperm.slane %v1537, %v1542
      %v1545 = vunpack.c.l.s4 1983009808
      %v1546 = vunpack.c.0.s8 %v1545
      %v1547 = vperm.slane %v1539, %v1546
      %v1548 = vrot.slane %v1501, 4
      %v1549 = vsel %vm161, %v1548, %v1493
      %v1550 = vrot.slane %v1493, 4
      %v1551 = vsel %vm161, %v1501, %v1550
      %v1553 = vunpack.c.l.s4 1983009808
      %v1554 = vunpack.c.0.s8 %v1553
      %v1555 = vperm.slane %v1549, %v1554
      %v1557 = vunpack.c.l.s4 1983009808
      %v1558 = vunpack.c.0.s8 %v1557
      %v1559 = vperm.slane %v1551, %v1558
      %v1560 = vrot.slane %v1513, 4
      %v1561 = vsel %vm161, %v1560, %v1505
      %v1562 = vrot.slane %v1505, 4
      %v1563 = vsel %vm161, %v1513, %v1562
      %v1565 = vunpack.c.l.s4 1983009808
      %v1566 = vunpack.c.0.s8 %v1565
      %v1567 = vperm.slane %v1561, %v1566
      %v1569 = vunpack.c.l.s4 1983009808
      %v1570 = vunpack.c.0.s8 %v1569
      %v1571 = vperm.slane %v1563, %v1570
      %v1572 = vrot.slane %v1517, 4
      %v1573 = vsel %vm161, %v1572, %v1509
      %v1574 = vrot.slane %v1509, 4
      %v1575 = vsel %vm161, %v1517, %v1574
      %v1577 = vunpack.c.l.s4 1983009808
      %v1578 = vunpack.c.0.s8 %v1577
      %v1579 = vperm.slane %v1573, %v1578
      %v1581 = vunpack.c.l.s4 1983009808
      %v1582 = vunpack.c.0.s8 %v1581
      %v1583 = vperm.slane %v1575, %v1582
      %v1584 = vrot.slane %v1555, 4
      %v1585 = vsel %vm161, %v1584, %v1543
      %v1586 = vrot.slane %v1543, 4
      %v1587 = vsel %vm161, %v1555, %v1586
      %v1589 = vunpack.c.l.s4 1934713408
      %v1590 = vunpack.c.0.s8 %v1589
      %v1591 = vperm.slane %v1585, %v1590
      %v1593 = vunpack.c.l.s4 1934713408
      %v1594 = vunpack.c.0.s8 %v1593
      %v1595 = vperm.slane %v1587, %v1594
      %v1596 = vrot.slane %v1559, 4
      %v1597 = vsel %vm161, %v1596, %v1547
      %v1598 = vrot.slane %v1547, 4
      %v1599 = vsel %vm161, %v1559, %v1598
      %v1601 = vunpack.c.l.s4 1934713408
      %v1602 = vunpack.c.0.s8 %v1601
      %v1603 = vperm.slane %v1597, %v1602
      %v1605 = vunpack.c.l.s4 1934713408
      %v1606 = vunpack.c.0.s8 %v1605
      %v1607 = vperm.slane %v1599, %v1606
      %v1608 = vrot.slane %v1579, 4
      %v1609 = vsel %vm161, %v1608, %v1567
      %v1610 = vrot.slane %v1567, 4
      %v1611 = vsel %vm161, %v1579, %v1610
      %v1613 = vunpack.c.l.s4 1934713408
      %v1614 = vunpack.c.0.s8 %v1613
      %v1615 = vperm.slane %v1609, %v1614
      %v1617 = vunpack.c.l.s4 1934713408
      %v1618 = vunpack.c.0.s8 %v1617
      %v1619 = vperm.slane %v1611, %v1618
      %v1620 = vrot.slane %v1583, 4
      %v1621 = vsel %vm161, %v1620, %v1571
      %v1622 = vrot.slane %v1571, 4
      %v1623 = vsel %vm161, %v1583, %v1622
      %v1625 = vunpack.c.l.s4 1934713408
      %v1626 = vunpack.c.0.s8 %v1625
      %v1627 = vperm.slane %v1621, %v1626
      %v1629 = vunpack.c.l.s4 1934713408
      %v1630 = vunpack.c.0.s8 %v1629
      %v1631 = vperm.slane %v1623, %v1630
      %v1632 = vrot.slane %v1615, 4
      %v1633 = vsel %vm161, %v1632, %v1591
      %v1634 = vrot.slane %v1591, 4
      %v1635 = vsel %vm161, %v1615, %v1634
      %v1636 = vrot.slane %v1619, 4
      %v1637 = vsel %vm161, %v1636, %v1595
      %v1638 = vrot.slane %v1595, 4
      %v1639 = vsel %vm161, %v1619, %v1638
      %v1640 = vrot.slane %v1627, 4
      %v1641 = vsel %vm161, %v1640, %v1603
      %v1642 = vrot.slane %v1603, 4
      %v1643 = vsel %vm161, %v1627, %v1642
      %v1644 = vrot.slane %v1631, 4
      %v1645 = vsel %vm161, %v1644, %v1607
      %v1646 = vrot.slane %v1607, 4
      %v1647 = vsel %vm161, %v1631, %v1646
      %v1648 = vrot.slane %v1499, 4
      %v1649 = vsel %vm161, %v1648, %v1491
      %v1650 = vrot.slane %v1491, 4
      %v1651 = vsel %vm161, %v1499, %v1650
      %v1653 = vunpack.c.l.s4 1983009808
      %v1654 = vunpack.c.0.s8 %v1653
      %v1655 = vperm.slane %v1649, %v1654
      %v1657 = vunpack.c.l.s4 1983009808
      %v1658 = vunpack.c.0.s8 %v1657
      %v1659 = vperm.slane %v1651, %v1658
      %v1660 = vrot.slane %v1503, 4
      %v1661 = vsel %vm161, %v1660, %v1495
      %v1662 = vrot.slane %v1495, 4
      %v1663 = vsel %vm161, %v1503, %v1662
      %v1665 = vunpack.c.l.s4 1983009808
      %v1666 = vunpack.c.0.s8 %v1665
      %v1667 = vperm.slane %v1661, %v1666
      %v1669 = vunpack.c.l.s4 1983009808
      %v1670 = vunpack.c.0.s8 %v1669
      %v1671 = vperm.slane %v1663, %v1670
      %v1672 = vrot.slane %v1515, 4
      %v1673 = vsel %vm161, %v1672, %v1507
      %v1674 = vrot.slane %v1507, 4
      %v1675 = vsel %vm161, %v1515, %v1674
      %v1677 = vunpack.c.l.s4 1983009808
      %v1678 = vunpack.c.0.s8 %v1677
      %v1679 = vperm.slane %v1673, %v1678
      %v1681 = vunpack.c.l.s4 1983009808
      %v1682 = vunpack.c.0.s8 %v1681
      %v1683 = vperm.slane %v1675, %v1682
      %v1684 = vrot.slane %v1519, 4
      %v1685 = vsel %vm161, %v1684, %v1511
      %v1686 = vrot.slane %v1511, 4
      %v1687 = vsel %vm161, %v1519, %v1686
      %v1689 = vunpack.c.l.s4 1983009808
      %v1690 = vunpack.c.0.s8 %v1689
      %v1691 = vperm.slane %v1685, %v1690
      %v1693 = vunpack.c.l.s4 1983009808
      %v1694 = vunpack.c.0.s8 %v1693
      %v1695 = vperm.slane %v1687, %v1694
      %v1696 = vrot.slane %v1667, 4
      %v1697 = vsel %vm161, %v1696, %v1655
      %v1698 = vrot.slane %v1655, 4
      %v1699 = vsel %vm161, %v1667, %v1698
      %v1701 = vunpack.c.l.s4 1934713408
      %v1702 = vunpack.c.0.s8 %v1701
      %v1703 = vperm.slane %v1697, %v1702
      %v1705 = vunpack.c.l.s4 1934713408
      %v1706 = vunpack.c.0.s8 %v1705
      %v1707 = vperm.slane %v1699, %v1706
      %v1708 = vrot.slane %v1671, 4
      %v1709 = vsel %vm161, %v1708, %v1659
      %v1710 = vrot.slane %v1659, 4
      %v1711 = vsel %vm161, %v1671, %v1710
      %v1713 = vunpack.c.l.s4 1934713408
      %v1714 = vunpack.c.0.s8 %v1713
      %v1715 = vperm.slane %v1709, %v1714
      %v1717 = vunpack.c.l.s4 1934713408
      %v1718 = vunpack.c.0.s8 %v1717
      %v1719 = vperm.slane %v1711, %v1718
      %v1720 = vrot.slane %v1691, 4
      %v1721 = vsel %vm161, %v1720, %v1679
      %v1722 = vrot.slane %v1679, 4
      %v1723 = vsel %vm161, %v1691, %v1722
      %v1725 = vunpack.c.l.s4 1934713408
      %v1726 = vunpack.c.0.s8 %v1725
      %v1727 = vperm.slane %v1721, %v1726
      %v1729 = vunpack.c.l.s4 1934713408
      %v1730 = vunpack.c.0.s8 %v1729
      %v1731 = vperm.slane %v1723, %v1730
      %v1732 = vrot.slane %v1695, 4
      %v1733 = vsel %vm161, %v1732, %v1683
      %v1734 = vrot.slane %v1683, 4
      %v1735 = vsel %vm161, %v1695, %v1734
      %v1737 = vunpack.c.l.s4 1934713408
      %v1738 = vunpack.c.0.s8 %v1737
      %v1739 = vperm.slane %v1733, %v1738
      %v1741 = vunpack.c.l.s4 1934713408
      %v1742 = vunpack.c.0.s8 %v1741
      %v1743 = vperm.slane %v1735, %v1742
      %v1744 = vrot.slane %v1727, 4
      %v1745 = vsel %vm161, %v1744, %v1703
      %v1746 = vrot.slane %v1703, 4
      %v1747 = vsel %vm161, %v1727, %v1746
      %v1748 = vrot.slane %v1731, 4
      %v1749 = vsel %vm161, %v1748, %v1707
      %v1750 = vrot.slane %v1707, 4
      %v1751 = vsel %vm161, %v1731, %v1750
      %v1752 = vrot.slane %v1739, 4
      %v1753 = vsel %vm161, %v1752, %v1715
      %v1754 = vrot.slane %v1715, 4
      %v1755 = vsel %vm161, %v1739, %v1754
      %v1756 = vrot.slane %v1743, 4
      %v1757 = vsel %vm161, %v1756, %v1719
      %v1758 = vrot.slane %v1719, 4
      %v1759 = vsel %vm161, %v1743, %v1758
      %1761 = vrot.lane.b32.xlu0 %v1635, 16
      %v1762 = vpop.permute.xlu0 %1761
      %1765 = vrot.lane.b32.xlu0 %v1637, 32
      %v1766 = vpop.permute.xlu0 %1765
      %1769 = vrot.lane.b32.xlu0 %v1639, 48
      %v1770 = vpop.permute.xlu0 %1769
      %1773 = vrot.lane.b32.xlu0 %v1641, 64
      %v1774 = vpop.permute.xlu0 %1773
      %1777 = vrot.lane.b32.xlu0 %v1643, 80
      %v1778 = vpop.permute.xlu0 %1777
      %1781 = vrot.lane.b32.xlu0 %v1645, 96
      %v1782 = vpop.permute.xlu0 %1781
      %1785 = vrot.lane.b32.xlu0 %v1647, 112
      %v1786 = vpop.permute.xlu0 %1785
      %1789 = vrot.lane.b32.xlu0 %v1747, 16
      %v1790 = vpop.permute.xlu0 %1789
      %1793 = vrot.lane.b32.xlu0 %v1749, 32
      %v1794 = vpop.permute.xlu0 %1793
      %1797 = vrot.lane.b32.xlu0 %v1751, 48
      %v1798 = vpop.permute.xlu0 %1797
      %1801 = vrot.lane.b32.xlu0 %v1753, 64
      %v1802 = vpop.permute.xlu0 %1801
      %1805 = vrot.lane.b32.xlu0 %v1755, 80
      %v1806 = vpop.permute.xlu0 %1805
      %1809 = vrot.lane.b32.xlu0 %v1757, 96
      %v1810 = vpop.permute.xlu0 %1809
      %1813 = vrot.lane.b32.xlu0 %v1759, 112
      %v1814 = vpop.permute.xlu0 %1813
      %v1816 = vsel %vm441, %v1633, %v1762
      %v1817 = vsel %vm443, %v1816, %v1766
      %v1818 = vsel %vm445, %v1817, %v1770
      %v1819 = vsel %vm447, %v1818, %v1774
      %v1820 = vsel %vm449, %v1819, %v1778
      %v1821 = vsel %vm451, %v1820, %v1782
      %v1822 = vsel %vm453, %v1821, %v1786
      %v1823 = vsel %vm441, %v1745, %v1790
      %v1824 = vsel %vm443, %v1823, %v1794
      %v1825 = vsel %vm445, %v1824, %v1798
      %v1826 = vsel %vm447, %v1825, %v1802
      %v1827 = vsel %vm449, %v1826, %v1806
      %v1828 = vsel %vm451, %v1827, %v1810
      %v1829 = vsel %vm453, %v1828, %v1814
      %1830 = vrot.lane.b32.xlu0 %v1162, 126
      %v1831 = vpop.permute.xlu0 %1830
      %1832 = vrot.lane.b32.xlu0 %v1163, 126
      %v1833 = vpop.permute.xlu0 %1832
      %1834 = vrot.lane.b32.xlu0 %v1164, 126
      %v1835 = vpop.permute.xlu0 %1834
      %1836 = vrot.lane.b32.xlu0 %v1165, 126
      %v1837 = vpop.permute.xlu0 %1836
      %1838 = vrot.lane.b32.xlu0 %v1166, 126
      %v1839 = vpop.permute.xlu0 %1838
      %1840 = vrot.lane.b32.xlu0 %v1167, 126
      %v1841 = vpop.permute.xlu0 %1840
      %1842 = vrot.lane.b32.xlu0 %v1168, 126
      %v1843 = vpop.permute.xlu0 %1842
      %1844 = vrot.lane.b32.xlu0 %v1169, 126
      %v1845 = vpop.permute.xlu0 %1844
      %1846 = vrot.lane.b32.xlu0 %v1170, 126
      %v1847 = vpop.permute.xlu0 %1846
      %1848 = vrot.lane.b32.xlu0 %v1171, 126
      %v1849 = vpop.permute.xlu0 %1848
      %1850 = vrot.lane.b32.xlu0 %v1172, 126
      %v1851 = vpop.permute.xlu0 %1850
      %1852 = vrot.lane.b32.xlu0 %v1173, 126
      %v1853 = vpop.permute.xlu0 %1852
      %1854 = vrot.lane.b32.xlu0 %v1174, 126
      %v1855 = vpop.permute.xlu0 %1854
      %1856 = vrot.lane.b32.xlu0 %v1175, 126
      %v1857 = vpop.permute.xlu0 %1856
      %1858 = vrot.lane.b32.xlu0 %v1176, 126
      %v1859 = vpop.permute.xlu0 %1858
      %1860 = vrot.lane.b32.xlu0 %v1177, 126
      %v1861 = vpop.permute.xlu0 %1860
      %v1878 = vrot.slane %v1839, 4
      %v1879 = vsel %vm161, %v1878, %v1831
      %v1880 = vrot.slane %v1831, 4
      %v1881 = vsel %vm161, %v1839, %v1880
      %v1883 = vunpack.c.l.s4 1983009808
      %v1884 = vunpack.c.0.s8 %v1883
      %v1885 = vperm.slane %v1879, %v1884
      %v1887 = vunpack.c.l.s4 1983009808
      %v1888 = vunpack.c.0.s8 %v1887
      %v1889 = vperm.slane %v1881, %v1888
      %v1890 = vrot.slane %v1843, 4
      %v1891 = vsel %vm161, %v1890, %v1835
      %v1892 = vrot.slane %v1835, 4
      %v1893 = vsel %vm161, %v1843, %v1892
      %v1895 = vunpack.c.l.s4 1983009808
      %v1896 = vunpack.c.0.s8 %v1895
      %v1897 = vperm.slane %v1891, %v1896
      %v1899 = vunpack.c.l.s4 1983009808
      %v1900 = vunpack.c.0.s8 %v1899
      %v1901 = vperm.slane %v1893, %v1900
      %v1902 = vrot.slane %v1855, 4
      %v1903 = vsel %vm161, %v1902, %v1847
      %v1904 = vrot.slane %v1847, 4
      %v1905 = vsel %vm161, %v1855, %v1904
      %v1907 = vunpack.c.l.s4 1983009808
      %v1908 = vunpack.c.0.s8 %v1907
      %v1909 = vperm.slane %v1903, %v1908
      %v1911 = vunpack.c.l.s4 1983009808
      %v1912 = vunpack.c.0.s8 %v1911
      %v1913 = vperm.slane %v1905, %v1912
      %v1914 = vrot.slane %v1859, 4
      %v1915 = vsel %vm161, %v1914, %v1851
      %v1916 = vrot.slane %v1851, 4
      %v1917 = vsel %vm161, %v1859, %v1916
      %v1919 = vunpack.c.l.s4 1983009808
      %v1920 = vunpack.c.0.s8 %v1919
      %v1921 = vperm.slane %v1915, %v1920
      %v1923 = vunpack.c.l.s4 1983009808
      %v1924 = vunpack.c.0.s8 %v1923
      %v1925 = vperm.slane %v1917, %v1924
      %v1926 = vrot.slane %v1897, 4
      %v1927 = vsel %vm161, %v1926, %v1885
      %v1928 = vrot.slane %v1885, 4
      %v1929 = vsel %vm161, %v1897, %v1928
      %v1931 = vunpack.c.l.s4 1934713408
      %v1932 = vunpack.c.0.s8 %v1931
      %v1933 = vperm.slane %v1927, %v1932
      %v1935 = vunpack.c.l.s4 1934713408
      %v1936 = vunpack.c.0.s8 %v1935
      %v1937 = vperm.slane %v1929, %v1936
      %v1938 = vrot.slane %v1901, 4
      %v1939 = vsel %vm161, %v1938, %v1889
      %v1940 = vrot.slane %v1889, 4
      %v1941 = vsel %vm161, %v1901, %v1940
      %v1943 = vunpack.c.l.s4 1934713408
      %v1944 = vunpack.c.0.s8 %v1943
      %v1945 = vperm.slane %v1939, %v1944
      %v1947 = vunpack.c.l.s4 1934713408
      %v1948 = vunpack.c.0.s8 %v1947
      %v1949 = vperm.slane %v1941, %v1948
      %v1950 = vrot.slane %v1921, 4
      %v1951 = vsel %vm161, %v1950, %v1909
      %v1952 = vrot.slane %v1909, 4
      %v1953 = vsel %vm161, %v1921, %v1952
      %v1955 = vunpack.c.l.s4 1934713408
      %v1956 = vunpack.c.0.s8 %v1955
      %v1957 = vperm.slane %v1951, %v1956
      %v1959 = vunpack.c.l.s4 1934713408
      %v1960 = vunpack.c.0.s8 %v1959
      %v1961 = vperm.slane %v1953, %v1960
      %v1962 = vrot.slane %v1925, 4
      %v1963 = vsel %vm161, %v1962, %v1913
      %v1964 = vrot.slane %v1913, 4
      %v1965 = vsel %vm161, %v1925, %v1964
      %v1967 = vunpack.c.l.s4 1934713408
      %v1968 = vunpack.c.0.s8 %v1967
      %v1969 = vperm.slane %v1963, %v1968
      %v1971 = vunpack.c.l.s4 1934713408
      %v1972 = vunpack.c.0.s8 %v1971
      %v1973 = vperm.slane %v1965, %v1972
      %v1974 = vrot.slane %v1957, 4
      %v1975 = vsel %vm161, %v1974, %v1933
      %v1976 = vrot.slane %v1933, 4
      %v1977 = vsel %vm161, %v1957, %v1976
      %v1978 = vrot.slane %v1961, 4
      %v1979 = vsel %vm161, %v1978, %v1937
      %v1980 = vrot.slane %v1937, 4
      %v1981 = vsel %vm161, %v1961, %v1980
      %v1982 = vrot.slane %v1969, 4
      %v1983 = vsel %vm161, %v1982, %v1945
      %v1984 = vrot.slane %v1945, 4
      %v1985 = vsel %vm161, %v1969, %v1984
      %v1986 = vrot.slane %v1973, 4
      %v1987 = vsel %vm161, %v1986, %v1949
      %v1988 = vrot.slane %v1949, 4
      %v1989 = vsel %vm161, %v1973, %v1988
      %v1990 = vrot.slane %v1841, 4
      %v1991 = vsel %vm161, %v1990, %v1833
      %v1992 = vrot.slane %v1833, 4
      %v1993 = vsel %vm161, %v1841, %v1992
      %v1995 = vunpack.c.l.s4 1983009808
      %v1996 = vunpack.c.0.s8 %v1995
      %v1997 = vperm.slane %v1991, %v1996
      %v1999 = vunpack.c.l.s4 1983009808
      %v2000 = vunpack.c.0.s8 %v1999
      %v2001 = vperm.slane %v1993, %v2000
      %v2002 = vrot.slane %v1845, 4
      %v2003 = vsel %vm161, %v2002, %v1837
      %v2004 = vrot.slane %v1837, 4
      %v2005 = vsel %vm161, %v1845, %v2004
      %v2007 = vunpack.c.l.s4 1983009808
      %v2008 = vunpack.c.0.s8 %v2007
      %v2009 = vperm.slane %v2003, %v2008
      %v2011 = vunpack.c.l.s4 1983009808
      %v2012 = vunpack.c.0.s8 %v2011
      %v2013 = vperm.slane %v2005, %v2012
      %v2014 = vrot.slane %v1857, 4
      %v2015 = vsel %vm161, %v2014, %v1849
      %v2016 = vrot.slane %v1849, 4
      %v2017 = vsel %vm161, %v1857, %v2016
      %v2019 = vunpack.c.l.s4 1983009808
      %v2020 = vunpack.c.0.s8 %v2019
      %v2021 = vperm.slane %v2015, %v2020
      %v2023 = vunpack.c.l.s4 1983009808
      %v2024 = vunpack.c.0.s8 %v2023
      %v2025 = vperm.slane %v2017, %v2024
      %v2026 = vrot.slane %v1861, 4
      %v2027 = vsel %vm161, %v2026, %v1853
      %v2028 = vrot.slane %v1853, 4
      %v2029 = vsel %vm161, %v1861, %v2028
      %v2031 = vunpack.c.l.s4 1983009808
      %v2032 = vunpack.c.0.s8 %v2031
      %v2033 = vperm.slane %v2027, %v2032
      %v2035 = vunpack.c.l.s4 1983009808
      %v2036 = vunpack.c.0.s8 %v2035
      %v2037 = vperm.slane %v2029, %v2036
      %v2038 = vrot.slane %v2009, 4
      %v2039 = vsel %vm161, %v2038, %v1997
      %v2040 = vrot.slane %v1997, 4
      %v2041 = vsel %vm161, %v2009, %v2040
      %v2043 = vunpack.c.l.s4 1934713408
      %v2044 = vunpack.c.0.s8 %v2043
      %v2045 = vperm.slane %v2039, %v2044
      %v2047 = vunpack.c.l.s4 1934713408
      %v2048 = vunpack.c.0.s8 %v2047
      %v2049 = vperm.slane %v2041, %v2048
      %v2050 = vrot.slane %v2013, 4
      %v2051 = vsel %vm161, %v2050, %v2001
      %v2052 = vrot.slane %v2001, 4
      %v2053 = vsel %vm161, %v2013, %v2052
      %v2055 = vunpack.c.l.s4 1934713408
      %v2056 = vunpack.c.0.s8 %v2055
      %v2057 = vperm.slane %v2051, %v2056
      %v2059 = vunpack.c.l.s4 1934713408
      %v2060 = vunpack.c.0.s8 %v2059
      %v2061 = vperm.slane %v2053, %v2060
      %v2062 = vrot.slane %v2033, 4
      %v2063 = vsel %vm161, %v2062, %v2021
      %v2064 = vrot.slane %v2021, 4
      %v2065 = vsel %vm161, %v2033, %v2064
      %v2067 = vunpack.c.l.s4 1934713408
      %v2068 = vunpack.c.0.s8 %v2067
      %v2069 = vperm.slane %v2063, %v2068
      %v2071 = vunpack.c.l.s4 1934713408
      %v2072 = vunpack.c.0.s8 %v2071
      %v2073 = vperm.slane %v2065, %v2072
      %v2074 = vrot.slane %v2037, 4
      %v2075 = vsel %vm161, %v2074, %v2025
      %v2076 = vrot.slane %v2025, 4
      %v2077 = vsel %vm161, %v2037, %v2076
      %v2079 = vunpack.c.l.s4 1934713408
      %v2080 = vunpack.c.0.s8 %v2079
      %v2081 = vperm.slane %v2075, %v2080
      %v2083 = vunpack.c.l.s4 1934713408
      %v2084 = vunpack.c.0.s8 %v2083
      %v2085 = vperm.slane %v2077, %v2084
      %v2086 = vrot.slane %v2069, 4
      %v2087 = vsel %vm161, %v2086, %v2045
      %v2088 = vrot.slane %v2045, 4
      %v2089 = vsel %vm161, %v2069, %v2088
      %v2090 = vrot.slane %v2073, 4
      %v2091 = vsel %vm161, %v2090, %v2049
      %v2092 = vrot.slane %v2049, 4
      %v2093 = vsel %vm161, %v2073, %v2092
      %v2094 = vrot.slane %v2081, 4
      %v2095 = vsel %vm161, %v2094, %v2057
      %v2096 = vrot.slane %v2057, 4
      %v2097 = vsel %vm161, %v2081, %v2096
      %v2098 = vrot.slane %v2085, 4
      %v2099 = vsel %vm161, %v2098, %v2061
      %v2100 = vrot.slane %v2061, 4
      %v2101 = vsel %vm161, %v2085, %v2100
      %2103 = vrot.lane.b32.xlu0 %v1977, 16
      %v2104 = vpop.permute.xlu0 %2103
      %2107 = vrot.lane.b32.xlu0 %v1979, 32
      %v2108 = vpop.permute.xlu0 %2107
      %2111 = vrot.lane.b32.xlu0 %v1981, 48
      %v2112 = vpop.permute.xlu0 %2111
      %2115 = vrot.lane.b32.xlu0 %v1983, 64
      %v2116 = vpop.permute.xlu0 %2115
      %2119 = vrot.lane.b32.xlu0 %v1985, 80
      %v2120 = vpop.permute.xlu0 %2119
      %2123 = vrot.lane.b32.xlu0 %v1987, 96
      %v2124 = vpop.permute.xlu0 %2123
      %2127 = vrot.lane.b32.xlu0 %v1989, 112
      %v2128 = vpop.permute.xlu0 %2127
      %2131 = vrot.lane.b32.xlu0 %v2089, 16
      %v2132 = vpop.permute.xlu0 %2131
      %2135 = vrot.lane.b32.xlu0 %v2091, 32
      %v2136 = vpop.permute.xlu0 %2135
      %2139 = vrot.lane.b32.xlu0 %v2093, 48
      %v2140 = vpop.permute.xlu0 %2139
      %2143 = vrot.lane.b32.xlu0 %v2095, 64
      %v2144 = vpop.permute.xlu0 %2143
      %2147 = vrot.lane.b32.xlu0 %v2097, 80
      %v2148 = vpop.permute.xlu0 %2147
      %2151 = vrot.lane.b32.xlu0 %v2099, 96
      %v2152 = vpop.permute.xlu0 %2151
      %2155 = vrot.lane.b32.xlu0 %v2101, 112
      %v2156 = vpop.permute.xlu0 %2155
      %v2158 = vsel %vm441, %v1975, %v2104
      %v2159 = vsel %vm443, %v2158, %v2108
      %v2160 = vsel %vm445, %v2159, %v2112
      %v2161 = vsel %vm447, %v2160, %v2116
      %v2162 = vsel %vm449, %v2161, %v2120
      %v2163 = vsel %vm451, %v2162, %v2124
      %v2164 = vsel %vm453, %v2163, %v2128
      %v2165 = vsel %vm441, %v2087, %v2132
      %v2166 = vsel %vm443, %v2165, %v2136
      %v2167 = vsel %vm445, %v2166, %v2140
      %v2168 = vsel %vm447, %v2167, %v2144
      %v2169 = vsel %vm449, %v2168, %v2148
      %v2170 = vsel %vm451, %v2169, %v2152
      %v2171 = vsel %vm453, %v2170, %v2156
      %v2172 = vld [vmem:[%s138 + $0x2] sm:$0xff]
      %v2173 = vld [vmem:[%s138 + $0xa] sm:$0xff]
      %v2174 = vld [vmem:[%s138 + $0x1a] sm:$0xff]
      %v2175 = vld [vmem:[%s138 + $0x22] sm:$0xff]
      %v2176 = vld [vmem:[%s138 + $0x32] sm:$0xff]
      %v2177 = vld [vmem:[%s138 + $0x3a] sm:$0xff]
      %v2178 = vld [vmem:[%s138 + $0x4a] sm:$0xff]
      %v2179 = vld [vmem:[%s138 + $0x52] sm:$0xff]
      %v2180 = vld [vmem:[%s138 + $0x62] sm:$0xff]
      %v2181 = vld [vmem:[%s138 + $0x6a] sm:$0xff]
      %v2182 = vld [vmem:[%s138 + $0x7a] sm:$0xff]
      %v2183 = vld [vmem:[%s138 + $0x82] sm:$0xff]
      %v2184 = vld [vmem:[%s138 + $0x92] sm:$0xff]
      %v2185 = vld [vmem:[%s138 + $0x9a] sm:$0xff]
      %v2186 = vld [vmem:[%s138 + $0xaa] sm:$0xff]
      %v2187 = vld [vmem:[%s138 + $0xb2] sm:$0xff]
      %v2188 = vrot.slane %v2176, 4
      %v2189 = vsel %vm161, %v2188, %v2172
      %v2190 = vrot.slane %v2172, 4
      %v2191 = vsel %vm161, %v2176, %v2190
      %v2193 = vunpack.c.l.s4 1983009808
      %v2194 = vunpack.c.0.s8 %v2193
      %v2195 = vperm.slane %v2189, %v2194
      %v2197 = vunpack.c.l.s4 1983009808
      %v2198 = vunpack.c.0.s8 %v2197
      %v2199 = vperm.slane %v2191, %v2198
      %v2200 = vrot.slane %v2178, 4
      %v2201 = vsel %vm161, %v2200, %v2174
      %v2202 = vrot.slane %v2174, 4
      %v2203 = vsel %vm161, %v2178, %v2202
      %v2205 = vunpack.c.l.s4 1983009808
      %v2206 = vunpack.c.0.s8 %v2205
      %v2207 = vperm.slane %v2201, %v2206
      %v2209 = vunpack.c.l.s4 1983009808
      %v2210 = vunpack.c.0.s8 %v2209
      %v2211 = vperm.slane %v2203, %v2210
      %v2212 = vrot.slane %v2184, 4
      %v2213 = vsel %vm161, %v2212, %v2180
      %v2214 = vrot.slane %v2180, 4
      %v2215 = vsel %vm161, %v2184, %v2214
      %v2217 = vunpack.c.l.s4 1983009808
      %v2218 = vunpack.c.0.s8 %v2217
      %v2219 = vperm.slane %v2213, %v2218
      %v2221 = vunpack.c.l.s4 1983009808
      %v2222 = vunpack.c.0.s8 %v2221
      %v2223 = vperm.slane %v2215, %v2222
      %v2224 = vrot.slane %v2186, 4
      %v2225 = vsel %vm161, %v2224, %v2182
      %v2226 = vrot.slane %v2182, 4
      %v2227 = vsel %vm161, %v2186, %v2226
      %v2229 = vunpack.c.l.s4 1983009808
      %v2230 = vunpack.c.0.s8 %v2229
      %v2231 = vperm.slane %v2225, %v2230
      %v2233 = vunpack.c.l.s4 1983009808
      %v2234 = vunpack.c.0.s8 %v2233
      %v2235 = vperm.slane %v2227, %v2234
      %v2236 = vrot.slane %v2207, 4
      %v2237 = vsel %vm161, %v2236, %v2195
      %v2238 = vrot.slane %v2195, 4
      %v2239 = vsel %vm161, %v2207, %v2238
      %v2241 = vunpack.c.l.s4 1934713408
      %v2242 = vunpack.c.0.s8 %v2241
      %v2243 = vperm.slane %v2237, %v2242
      %v2245 = vunpack.c.l.s4 1934713408
      %v2246 = vunpack.c.0.s8 %v2245
      %v2247 = vperm.slane %v2239, %v2246
      %v2248 = vrot.slane %v2211, 4
      %v2249 = vsel %vm161, %v2248, %v2199
      %v2250 = vrot.slane %v2199, 4
      %v2251 = vsel %vm161, %v2211, %v2250
      %v2253 = vunpack.c.l.s4 1934713408
      %v2254 = vunpack.c.0.s8 %v2253
      %v2255 = vperm.slane %v2249, %v2254
      %v2257 = vunpack.c.l.s4 1934713408
      %v2258 = vunpack.c.0.s8 %v2257
      %v2259 = vperm.slane %v2251, %v2258
      %v2260 = vrot.slane %v2231, 4
      %v2261 = vsel %vm161, %v2260, %v2219
      %v2262 = vrot.slane %v2219, 4
      %v2263 = vsel %vm161, %v2231, %v2262
      %v2265 = vunpack.c.l.s4 1934713408
      %v2266 = vunpack.c.0.s8 %v2265
      %v2267 = vperm.slane %v2261, %v2266
      %v2269 = vunpack.c.l.s4 1934713408
      %v2270 = vunpack.c.0.s8 %v2269
      %v2271 = vperm.slane %v2263, %v2270
      %v2272 = vrot.slane %v2235, 4
      %v2273 = vsel %vm161, %v2272, %v2223
      %v2274 = vrot.slane %v2223, 4
      %v2275 = vsel %vm161, %v2235, %v2274
      %v2277 = vunpack.c.l.s4 1934713408
      %v2278 = vunpack.c.0.s8 %v2277
      %v2279 = vperm.slane %v2273, %v2278
      %v2281 = vunpack.c.l.s4 1934713408
      %v2282 = vunpack.c.0.s8 %v2281
      %v2283 = vperm.slane %v2275, %v2282
      %v2284 = vrot.slane %v2267, 4
      %v2285 = vsel %vm161, %v2284, %v2243
      %v2286 = vrot.slane %v2243, 4
      %v2287 = vsel %vm161, %v2267, %v2286
      %v2288 = vrot.slane %v2271, 4
      %v2289 = vsel %vm161, %v2288, %v2247
      %v2290 = vrot.slane %v2247, 4
      %v2291 = vsel %vm161, %v2271, %v2290
      %v2292 = vrot.slane %v2279, 4
      %v2293 = vsel %vm161, %v2292, %v2255
      %v2294 = vrot.slane %v2255, 4
      %v2295 = vsel %vm161, %v2279, %v2294
      %v2296 = vrot.slane %v2283, 4
      %v2297 = vsel %vm161, %v2296, %v2259
      %v2298 = vrot.slane %v2259, 4
      %v2299 = vsel %vm161, %v2283, %v2298
      %v2300 = vrot.slane %v2177, 4
      %v2301 = vsel %vm161, %v2300, %v2173
      %v2302 = vrot.slane %v2173, 4
      %v2303 = vsel %vm161, %v2177, %v2302
      %v2305 = vunpack.c.l.s4 1983009808
      %v2306 = vunpack.c.0.s8 %v2305
      %v2307 = vperm.slane %v2301, %v2306
      %v2309 = vunpack.c.l.s4 1983009808
      %v2310 = vunpack.c.0.s8 %v2309
      %v2311 = vperm.slane %v2303, %v2310
      %v2312 = vrot.slane %v2179, 4
      %v2313 = vsel %vm161, %v2312, %v2175
      %v2314 = vrot.slane %v2175, 4
      %v2315 = vsel %vm161, %v2179, %v2314
      %v2317 = vunpack.c.l.s4 1983009808
      %v2318 = vunpack.c.0.s8 %v2317
      %v2319 = vperm.slane %v2313, %v2318
      %v2321 = vunpack.c.l.s4 1983009808
      %v2322 = vunpack.c.0.s8 %v2321
      %v2323 = vperm.slane %v2315, %v2322
      %v2324 = vrot.slane %v2185, 4
      %v2325 = vsel %vm161, %v2324, %v2181
      %v2326 = vrot.slane %v2181, 4
      %v2327 = vsel %vm161, %v2185, %v2326
      %v2329 = vunpack.c.l.s4 1983009808
      %v2330 = vunpack.c.0.s8 %v2329
      %v2331 = vperm.slane %v2325, %v2330
      %v2333 = vunpack.c.l.s4 1983009808
      %v2334 = vunpack.c.0.s8 %v2333
      %v2335 = vperm.slane %v2327, %v2334
      %v2336 = vrot.slane %v2187, 4
      %v2337 = vsel %vm161, %v2336, %v2183
      %v2338 = vrot.slane %v2183, 4
      %v2339 = vsel %vm161, %v2187, %v2338
      %v2341 = vunpack.c.l.s4 1983009808
      %v2342 = vunpack.c.0.s8 %v2341
      %v2343 = vperm.slane %v2337, %v2342
      %v2345 = vunpack.c.l.s4 1983009808
      %v2346 = vunpack.c.0.s8 %v2345
      %v2347 = vperm.slane %v2339, %v2346
      %v2348 = vrot.slane %v2319, 4
      %v2349 = vsel %vm161, %v2348, %v2307
      %v2350 = vrot.slane %v2307, 4
      %v2351 = vsel %vm161, %v2319, %v2350
      %v2353 = vunpack.c.l.s4 1934713408
      %v2354 = vunpack.c.0.s8 %v2353
      %v2355 = vperm.slane %v2349, %v2354
      %v2357 = vunpack.c.l.s4 1934713408
      %v2358 = vunpack.c.0.s8 %v2357
      %v2359 = vperm.slane %v2351, %v2358
      %v2360 = vrot.slane %v2323, 4
      %v2361 = vsel %vm161, %v2360, %v2311
      %v2362 = vrot.slane %v2311, 4
      %v2363 = vsel %vm161, %v2323, %v2362
      %v2365 = vunpack.c.l.s4 1934713408
      %v2366 = vunpack.c.0.s8 %v2365
      %v2367 = vperm.slane %v2361, %v2366
      %v2369 = vunpack.c.l.s4 1934713408
      %v2370 = vunpack.c.0.s8 %v2369
      %v2371 = vperm.slane %v2363, %v2370
      %v2372 = vrot.slane %v2343, 4
      %v2373 = vsel %vm161, %v2372, %v2331
      %v2374 = vrot.slane %v2331, 4
      %v2375 = vsel %vm161, %v2343, %v2374
      %v2377 = vunpack.c.l.s4 1934713408
      %v2378 = vunpack.c.0.s8 %v2377
      %v2379 = vperm.slane %v2373, %v2378
      %v2381 = vunpack.c.l.s4 1934713408
      %v2382 = vunpack.c.0.s8 %v2381
      %v2383 = vperm.slane %v2375, %v2382
      %v2384 = vrot.slane %v2347, 4
      %v2385 = vsel %vm161, %v2384, %v2335
      %v2386 = vrot.slane %v2335, 4
      %v2387 = vsel %vm161, %v2347, %v2386
      %v2389 = vunpack.c.l.s4 1934713408
      %v2390 = vunpack.c.0.s8 %v2389
      %v2391 = vperm.slane %v2385, %v2390
      %v2393 = vunpack.c.l.s4 1934713408
      %v2394 = vunpack.c.0.s8 %v2393
      %v2395 = vperm.slane %v2387, %v2394
      %v2396 = vrot.slane %v2379, 4
      %v2397 = vsel %vm161, %v2396, %v2355
      %v2398 = vrot.slane %v2355, 4
      %v2399 = vsel %vm161, %v2379, %v2398
      %v2400 = vrot.slane %v2383, 4
      %v2401 = vsel %vm161, %v2400, %v2359
      %v2402 = vrot.slane %v2359, 4
      %v2403 = vsel %vm161, %v2383, %v2402
      %v2404 = vrot.slane %v2391, 4
      %v2405 = vsel %vm161, %v2404, %v2367
      %v2406 = vrot.slane %v2367, 4
      %v2407 = vsel %vm161, %v2391, %v2406
      %v2408 = vrot.slane %v2395, 4
      %v2409 = vsel %vm161, %v2408, %v2371
      %v2410 = vrot.slane %v2371, 4
      %v2411 = vsel %vm161, %v2395, %v2410
      %2413 = vrot.lane.b32.xlu0 %v2287, 16
      %v2414 = vpop.permute.xlu0 %2413
      %2417 = vrot.lane.b32.xlu0 %v2289, 32
      %v2418 = vpop.permute.xlu0 %2417
      %2421 = vrot.lane.b32.xlu0 %v2291, 48
      %v2422 = vpop.permute.xlu0 %2421
      %2425 = vrot.lane.b32.xlu0 %v2293, 64
      %v2426 = vpop.permute.xlu0 %2425
      %2429 = vrot.lane.b32.xlu0 %v2295, 80
      %v2430 = vpop.permute.xlu0 %2429
      %2433 = vrot.lane.b32.xlu0 %v2297, 96
      %v2434 = vpop.permute.xlu0 %2433
      %2437 = vrot.lane.b32.xlu0 %v2299, 112
      %v2438 = vpop.permute.xlu0 %2437
      %2441 = vrot.lane.b32.xlu0 %v2399, 16
      %v2442 = vpop.permute.xlu0 %2441
      %2445 = vrot.lane.b32.xlu0 %v2401, 32
      %v2446 = vpop.permute.xlu0 %2445
      %2449 = vrot.lane.b32.xlu0 %v2403, 48
      %v2450 = vpop.permute.xlu0 %2449
      %2453 = vrot.lane.b32.xlu0 %v2405, 64
      %v2454 = vpop.permute.xlu0 %2453
      %2457 = vrot.lane.b32.xlu0 %v2407, 80
      %v2458 = vpop.permute.xlu0 %2457
      %2461 = vrot.lane.b32.xlu0 %v2409, 96
      %v2462 = vpop.permute.xlu0 %2461
      %2465 = vrot.lane.b32.xlu0 %v2411, 112
      %v2466 = vpop.permute.xlu0 %2465
      %v2468 = vsel %vm441, %v2285, %v2414
      %v2469 = vsel %vm443, %v2468, %v2418
      %v2470 = vsel %vm445, %v2469, %v2422
      %v2471 = vsel %vm447, %v2470, %v2426
      %v2472 = vsel %vm449, %v2471, %v2430
      %v2473 = vsel %vm451, %v2472, %v2434
      %v2474 = vsel %vm453, %v2473, %v2438
      %v2475 = vsel %vm441, %v2397, %v2442
      %v2476 = vsel %vm443, %v2475, %v2446
      %v2477 = vsel %vm445, %v2476, %v2450
      %v2478 = vsel %vm447, %v2477, %v2454
      %v2479 = vsel %vm449, %v2478, %v2458
      %v2480 = vsel %vm451, %v2479, %v2462
      %v2481 = vsel %vm453, %v2480, %v2466
      %2498 = vrot.lane.b32.xlu0 %v2172, 127
      %v2499 = vpop.permute.xlu0 %2498
      %2500 = vrot.lane.b32.xlu0 %v2173, 127
      %v2501 = vpop.permute.xlu0 %2500
      %2502 = vrot.lane.b32.xlu0 %v2174, 127
      %v2503 = vpop.permute.xlu0 %2502
      %2504 = vrot.lane.b32.xlu0 %v2175, 127
      %v2505 = vpop.permute.xlu0 %2504
      %2506 = vrot.lane.b32.xlu0 %v2176, 127
      %v2507 = vpop.permute.xlu0 %2506
      %2508 = vrot.lane.b32.xlu0 %v2177, 127
      %v2509 = vpop.permute.xlu0 %2508
      %2510 = vrot.lane.b32.xlu0 %v2178, 127
      %v2511 = vpop.permute.xlu0 %2510
      %2512 = vrot.lane.b32.xlu0 %v2179, 127
      %v2513 = vpop.permute.xlu0 %2512
      %2514 = vrot.lane.b32.xlu0 %v2180, 127
      %v2515 = vpop.permute.xlu0 %2514
      %2516 = vrot.lane.b32.xlu0 %v2181, 127
      %v2517 = vpop.permute.xlu0 %2516
      %2518 = vrot.lane.b32.xlu0 %v2182, 127
      %v2519 = vpop.permute.xlu0 %2518
      %2520 = vrot.lane.b32.xlu0 %v2183, 127
      %v2521 = vpop.permute.xlu0 %2520
      %2522 = vrot.lane.b32.xlu0 %v2184, 127
      %v2523 = vpop.permute.xlu0 %2522
      %2524 = vrot.lane.b32.xlu0 %v2185, 127
      %v2525 = vpop.permute.xlu0 %2524
      %2526 = vrot.lane.b32.xlu0 %v2186, 127
      %v2527 = vpop.permute.xlu0 %2526
      %2528 = vrot.lane.b32.xlu0 %v2187, 127
      %v2529 = vpop.permute.xlu0 %2528
      %v2546 = vrot.slane %v2507, 4
      %v2547 = vsel %vm161, %v2546, %v2499
      %v2548 = vrot.slane %v2499, 4
      %v2549 = vsel %vm161, %v2507, %v2548
      %v2551 = vunpack.c.l.s4 1983009808
      %v2552 = vunpack.c.0.s8 %v2551
      %v2553 = vperm.slane %v2547, %v2552
      %v2555 = vunpack.c.l.s4 1983009808
      %v2556 = vunpack.c.0.s8 %v2555
      %v2557 = vperm.slane %v2549, %v2556
      %v2558 = vrot.slane %v2511, 4
      %v2559 = vsel %vm161, %v2558, %v2503
      %v2560 = vrot.slane %v2503, 4
      %v2561 = vsel %vm161, %v2511, %v2560
      %v2563 = vunpack.c.l.s4 1983009808
      %v2564 = vunpack.c.0.s8 %v2563
      %v2565 = vperm.slane %v2559, %v2564
      %v2567 = vunpack.c.l.s4 1983009808
      %v2568 = vunpack.c.0.s8 %v2567
      %v2569 = vperm.slane %v2561, %v2568
      %v2570 = vrot.slane %v2523, 4
      %v2571 = vsel %vm161, %v2570, %v2515
      %v2572 = vrot.slane %v2515, 4
      %v2573 = vsel %vm161, %v2523, %v2572
      %v2575 = vunpack.c.l.s4 1983009808
      %v2576 = vunpack.c.0.s8 %v2575
      %v2577 = vperm.slane %v2571, %v2576
      %v2579 = vunpack.c.l.s4 1983009808
      %v2580 = vunpack.c.0.s8 %v2579
      %v2581 = vperm.slane %v2573, %v2580
      %v2582 = vrot.slane %v2527, 4
      %v2583 = vsel %vm161, %v2582, %v2519
      %v2584 = vrot.slane %v2519, 4
      %v2585 = vsel %vm161, %v2527, %v2584
      %v2587 = vunpack.c.l.s4 1983009808
      %v2588 = vunpack.c.0.s8 %v2587
      %v2589 = vperm.slane %v2583, %v2588
      %v2591 = vunpack.c.l.s4 1983009808
      %v2592 = vunpack.c.0.s8 %v2591
      %v2593 = vperm.slane %v2585, %v2592
      %v2594 = vrot.slane %v2565, 4
      %v2595 = vsel %vm161, %v2594, %v2553
      %v2596 = vrot.slane %v2553, 4
      %v2597 = vsel %vm161, %v2565, %v2596
      %v2599 = vunpack.c.l.s4 1934713408
      %v2600 = vunpack.c.0.s8 %v2599
      %v2601 = vperm.slane %v2595, %v2600
      %v2603 = vunpack.c.l.s4 1934713408
      %v2604 = vunpack.c.0.s8 %v2603
      %v2605 = vperm.slane %v2597, %v2604
      %v2606 = vrot.slane %v2569, 4
      %v2607 = vsel %vm161, %v2606, %v2557
      %v2608 = vrot.slane %v2557, 4
      %v2609 = vsel %vm161, %v2569, %v2608
      %v2611 = vunpack.c.l.s4 1934713408
      %v2612 = vunpack.c.0.s8 %v2611
      %v2613 = vperm.slane %v2607, %v2612
      %v2615 = vunpack.c.l.s4 1934713408
      %v2616 = vunpack.c.0.s8 %v2615
      %v2617 = vperm.slane %v2609, %v2616
      %v2618 = vrot.slane %v2589, 4
      %v2619 = vsel %vm161, %v2618, %v2577
      %v2620 = vrot.slane %v2577, 4
      %v2621 = vsel %vm161, %v2589, %v2620
      %v2623 = vunpack.c.l.s4 1934713408
      %v2624 = vunpack.c.0.s8 %v2623
      %v2625 = vperm.slane %v2619, %v2624
      %v2627 = vunpack.c.l.s4 1934713408
      %v2628 = vunpack.c.0.s8 %v2627
      %v2629 = vperm.slane %v2621, %v2628
      %v2630 = vrot.slane %v2593, 4
      %v2631 = vsel %vm161, %v2630, %v2581
      %v2632 = vrot.slane %v2581, 4
      %v2633 = vsel %vm161, %v2593, %v2632
      %v2635 = vunpack.c.l.s4 1934713408
      %v2636 = vunpack.c.0.s8 %v2635
      %v2637 = vperm.slane %v2631, %v2636
      %v2639 = vunpack.c.l.s4 1934713408
      %v2640 = vunpack.c.0.s8 %v2639
      %v2641 = vperm.slane %v2633, %v2640
      %v2642 = vrot.slane %v2625, 4
      %v2643 = vsel %vm161, %v2642, %v2601
      %v2644 = vrot.slane %v2601, 4
      %v2645 = vsel %vm161, %v2625, %v2644
      %v2646 = vrot.slane %v2629, 4
      %v2647 = vsel %vm161, %v2646, %v2605
      %v2648 = vrot.slane %v2605, 4
      %v2649 = vsel %vm161, %v2629, %v2648
      %v2650 = vrot.slane %v2637, 4
      %v2651 = vsel %vm161, %v2650, %v2613
      %v2652 = vrot.slane %v2613, 4
      %v2653 = vsel %vm161, %v2637, %v2652
      %v2654 = vrot.slane %v2641, 4
      %v2655 = vsel %vm161, %v2654, %v2617
      %v2656 = vrot.slane %v2617, 4
      %v2657 = vsel %vm161, %v2641, %v2656
      %v2658 = vrot.slane %v2509, 4
      %v2659 = vsel %vm161, %v2658, %v2501
      %v2660 = vrot.slane %v2501, 4
      %v2661 = vsel %vm161, %v2509, %v2660
      %v2663 = vunpack.c.l.s4 1983009808
      %v2664 = vunpack.c.0.s8 %v2663
      %v2665 = vperm.slane %v2659, %v2664
      %v2667 = vunpack.c.l.s4 1983009808
      %v2668 = vunpack.c.0.s8 %v2667
      %v2669 = vperm.slane %v2661, %v2668
      %v2670 = vrot.slane %v2513, 4
      %v2671 = vsel %vm161, %v2670, %v2505
      %v2672 = vrot.slane %v2505, 4
      %v2673 = vsel %vm161, %v2513, %v2672
      %v2675 = vunpack.c.l.s4 1983009808
      %v2676 = vunpack.c.0.s8 %v2675
      %v2677 = vperm.slane %v2671, %v2676
      %v2679 = vunpack.c.l.s4 1983009808
      %v2680 = vunpack.c.0.s8 %v2679
      %v2681 = vperm.slane %v2673, %v2680
      %v2682 = vrot.slane %v2525, 4
      %v2683 = vsel %vm161, %v2682, %v2517
      %v2684 = vrot.slane %v2517, 4
      %v2685 = vsel %vm161, %v2525, %v2684
      %v2687 = vunpack.c.l.s4 1983009808
      %v2688 = vunpack.c.0.s8 %v2687
      %v2689 = vperm.slane %v2683, %v2688
      %v2691 = vunpack.c.l.s4 1983009808
      %v2692 = vunpack.c.0.s8 %v2691
      %v2693 = vperm.slane %v2685, %v2692
      %v2694 = vrot.slane %v2529, 4
      %v2695 = vsel %vm161, %v2694, %v2521
      %v2696 = vrot.slane %v2521, 4
      %v2697 = vsel %vm161, %v2529, %v2696
      %v2699 = vunpack.c.l.s4 1983009808
      %v2700 = vunpack.c.0.s8 %v2699
      %v2701 = vperm.slane %v2695, %v2700
      %v2703 = vunpack.c.l.s4 1983009808
      %v2704 = vunpack.c.0.s8 %v2703
      %v2705 = vperm.slane %v2697, %v2704
      %v2706 = vrot.slane %v2677, 4
      %v2707 = vsel %vm161, %v2706, %v2665
      %v2708 = vrot.slane %v2665, 4
      %v2709 = vsel %vm161, %v2677, %v2708
      %v2711 = vunpack.c.l.s4 1934713408
      %v2712 = vunpack.c.0.s8 %v2711
      %v2713 = vperm.slane %v2707, %v2712
      %v2715 = vunpack.c.l.s4 1934713408
      %v2716 = vunpack.c.0.s8 %v2715
      %v2717 = vperm.slane %v2709, %v2716
      %v2718 = vrot.slane %v2681, 4
      %v2719 = vsel %vm161, %v2718, %v2669
      %v2720 = vrot.slane %v2669, 4
      %v2721 = vsel %vm161, %v2681, %v2720
      %v2723 = vunpack.c.l.s4 1934713408
      %v2724 = vunpack.c.0.s8 %v2723
      %v2725 = vperm.slane %v2719, %v2724
      %v2727 = vunpack.c.l.s4 1934713408
      %v2728 = vunpack.c.0.s8 %v2727
      %v2729 = vperm.slane %v2721, %v2728
      %v2730 = vrot.slane %v2701, 4
      %v2731 = vsel %vm161, %v2730, %v2689
      %v2732 = vrot.slane %v2689, 4
      %v2733 = vsel %vm161, %v2701, %v2732
      %v2735 = vunpack.c.l.s4 1934713408
      %v2736 = vunpack.c.0.s8 %v2735
      %v2737 = vperm.slane %v2731, %v2736
      %v2739 = vunpack.c.l.s4 1934713408
      %v2740 = vunpack.c.0.s8 %v2739
      %v2741 = vperm.slane %v2733, %v2740
      %v2742 = vrot.slane %v2705, 4
      %v2743 = vsel %vm161, %v2742, %v2693
      %v2744 = vrot.slane %v2693, 4
      %v2745 = vsel %vm161, %v2705, %v2744
      %v2747 = vunpack.c.l.s4 1934713408
      %v2748 = vunpack.c.0.s8 %v2747
      %v2749 = vperm.slane %v2743, %v2748
      %v2751 = vunpack.c.l.s4 1934713408
      %v2752 = vunpack.c.0.s8 %v2751
      %v2753 = vperm.slane %v2745, %v2752
      %v2754 = vrot.slane %v2737, 4
      %v2755 = vsel %vm161, %v2754, %v2713
      %v2756 = vrot.slane %v2713, 4
      %v2757 = vsel %vm161, %v2737, %v2756
      %v2758 = vrot.slane %v2741, 4
      %v2759 = vsel %vm161, %v2758, %v2717
      %v2760 = vrot.slane %v2717, 4
      %v2761 = vsel %vm161, %v2741, %v2760
      %v2762 = vrot.slane %v2749, 4
      %v2763 = vsel %vm161, %v2762, %v2725
      %v2764 = vrot.slane %v2725, 4
      %v2765 = vsel %vm161, %v2749, %v2764
      %v2766 = vrot.slane %v2753, 4
      %v2767 = vsel %vm161, %v2766, %v2729
      %v2768 = vrot.slane %v2729, 4
      %v2769 = vsel %vm161, %v2753, %v2768
      %2771 = vrot.lane.b32.xlu0 %v2645, 16
      %v2772 = vpop.permute.xlu0 %2771
      %2775 = vrot.lane.b32.xlu0 %v2647, 32
      %v2776 = vpop.permute.xlu0 %2775
      %2779 = vrot.lane.b32.xlu0 %v2649, 48
      %v2780 = vpop.permute.xlu0 %2779
      %2783 = vrot.lane.b32.xlu0 %v2651, 64
      %v2784 = vpop.permute.xlu0 %2783
      %2787 = vrot.lane.b32.xlu0 %v2653, 80
      %v2788 = vpop.permute.xlu0 %2787
      %2791 = vrot.lane.b32.xlu0 %v2655, 96
      %v2792 = vpop.permute.xlu0 %2791
      %2795 = vrot.lane.b32.xlu0 %v2657, 112
      %v2796 = vpop.permute.xlu0 %2795
      %2799 = vrot.lane.b32.xlu0 %v2757, 16
      %v2800 = vpop.permute.xlu0 %2799
      %2803 = vrot.lane.b32.xlu0 %v2759, 32
      %v2804 = vpop.permute.xlu0 %2803
      %2807 = vrot.lane.b32.xlu0 %v2761, 48
      %v2808 = vpop.permute.xlu0 %2807
      %2811 = vrot.lane.b32.xlu0 %v2763, 64
      %v2812 = vpop.permute.xlu0 %2811
      %2815 = vrot.lane.b32.xlu0 %v2765, 80
      %v2816 = vpop.permute.xlu0 %2815
      %2819 = vrot.lane.b32.xlu0 %v2767, 96
      %v2820 = vpop.permute.xlu0 %2819
      %2823 = vrot.lane.b32.xlu0 %v2769, 112
      %v2824 = vpop.permute.xlu0 %2823
      %v2826 = vsel %vm441, %v2643, %v2772
      %v2827 = vsel %vm443, %v2826, %v2776
      %v2828 = vsel %vm445, %v2827, %v2780
      %v2829 = vsel %vm447, %v2828, %v2784
      %v2830 = vsel %vm449, %v2829, %v2788
      %v2831 = vsel %vm451, %v2830, %v2792
      %v2832 = vsel %vm453, %v2831, %v2796
      %v2833 = vsel %vm441, %v2755, %v2800
      %v2834 = vsel %vm443, %v2833, %v2804
      %v2835 = vsel %vm445, %v2834, %v2808
      %v2836 = vsel %vm447, %v2835, %v2812
      %v2837 = vsel %vm449, %v2836, %v2816
      %v2838 = vsel %vm451, %v2837, %v2820
      %v2839 = vsel %vm453, %v2838, %v2824
      %2840 = vrot.lane.b32.xlu0 %v2172, 126
      %v2841 = vpop.permute.xlu0 %2840
      %2842 = vrot.lane.b32.xlu0 %v2173, 126
      %v2843 = vpop.permute.xlu0 %2842
      %2844 = vrot.lane.b32.xlu0 %v2174, 126
      %v2845 = vpop.permute.xlu0 %2844
      %2846 = vrot.lane.b32.xlu0 %v2175, 126
      %v2847 = vpop.permute.xlu0 %2846
      %2848 = vrot.lane.b32.xlu0 %v2176, 126
      %v2849 = vpop.permute.xlu0 %2848
      %2850 = vrot.lane.b32.xlu0 %v2177, 126
      %v2851 = vpop.permute.xlu0 %2850
      %2852 = vrot.lane.b32.xlu0 %v2178, 126
      %v2853 = vpop.permute.xlu0 %2852
      %2854 = vrot.lane.b32.xlu0 %v2179, 126
      %v2855 = vpop.permute.xlu0 %2854
      %2856 = vrot.lane.b32.xlu0 %v2180, 126
      %v2857 = vpop.permute.xlu0 %2856
      %2858 = vrot.lane.b32.xlu0 %v2181, 126
      %v2859 = vpop.permute.xlu0 %2858
      %2860 = vrot.lane.b32.xlu0 %v2182, 126
      %v2861 = vpop.permute.xlu0 %2860
      %2862 = vrot.lane.b32.xlu0 %v2183, 126
      %v2863 = vpop.permute.xlu0 %2862
      %2864 = vrot.lane.b32.xlu0 %v2184, 126
      %v2865 = vpop.permute.xlu0 %2864
      %2866 = vrot.lane.b32.xlu0 %v2185, 126
      %v2867 = vpop.permute.xlu0 %2866
      %2868 = vrot.lane.b32.xlu0 %v2186, 126
      %v2869 = vpop.permute.xlu0 %2868
      %2870 = vrot.lane.b32.xlu0 %v2187, 126
      %v2871 = vpop.permute.xlu0 %2870
      %v2888 = vrot.slane %v2849, 4
      %v2889 = vsel %vm161, %v2888, %v2841
      %v2890 = vrot.slane %v2841, 4
      %v2891 = vsel %vm161, %v2849, %v2890
      %v2893 = vunpack.c.l.s4 1983009808
      %v2894 = vunpack.c.0.s8 %v2893
      %v2895 = vperm.slane %v2889, %v2894
      %v2897 = vunpack.c.l.s4 1983009808
      %v2898 = vunpack.c.0.s8 %v2897
      %v2899 = vperm.slane %v2891, %v2898
      %v2900 = vrot.slane %v2853, 4
      %v2901 = vsel %vm161, %v2900, %v2845
      %v2902 = vrot.slane %v2845, 4
      %v2903 = vsel %vm161, %v2853, %v2902
      %v2905 = vunpack.c.l.s4 1983009808
      %v2906 = vunpack.c.0.s8 %v2905
      %v2907 = vperm.slane %v2901, %v2906
      %v2909 = vunpack.c.l.s4 1983009808
      %v2910 = vunpack.c.0.s8 %v2909
      %v2911 = vperm.slane %v2903, %v2910
      %v2912 = vrot.slane %v2865, 4
      %v2913 = vsel %vm161, %v2912, %v2857
      %v2914 = vrot.slane %v2857, 4
      %v2915 = vsel %vm161, %v2865, %v2914
      %v2917 = vunpack.c.l.s4 1983009808
      %v2918 = vunpack.c.0.s8 %v2917
      %v2919 = vperm.slane %v2913, %v2918
      %v2921 = vunpack.c.l.s4 1983009808
      %v2922 = vunpack.c.0.s8 %v2921
      %v2923 = vperm.slane %v2915, %v2922
      %v2924 = vrot.slane %v2869, 4
      %v2925 = vsel %vm161, %v2924, %v2861
      %v2926 = vrot.slane %v2861, 4
      %v2927 = vsel %vm161, %v2869, %v2926
      %v2929 = vunpack.c.l.s4 1983009808
      %v2930 = vunpack.c.0.s8 %v2929
      %v2931 = vperm.slane %v2925, %v2930
      %v2933 = vunpack.c.l.s4 1983009808
      %v2934 = vunpack.c.0.s8 %v2933
      %v2935 = vperm.slane %v2927, %v2934
      %v2936 = vrot.slane %v2907, 4
      %v2937 = vsel %vm161, %v2936, %v2895
      %v2938 = vrot.slane %v2895, 4
      %v2939 = vsel %vm161, %v2907, %v2938
      %v2941 = vunpack.c.l.s4 1934713408
      %v2942 = vunpack.c.0.s8 %v2941
      %v2943 = vperm.slane %v2937, %v2942
      %v2945 = vunpack.c.l.s4 1934713408
      %v2946 = vunpack.c.0.s8 %v2945
      %v2947 = vperm.slane %v2939, %v2946
      %v2948 = vrot.slane %v2911, 4
      %v2949 = vsel %vm161, %v2948, %v2899
      %v2950 = vrot.slane %v2899, 4
      %v2951 = vsel %vm161, %v2911, %v2950
      %v2953 = vunpack.c.l.s4 1934713408
      %v2954 = vunpack.c.0.s8 %v2953
      %v2955 = vperm.slane %v2949, %v2954
      %v2957 = vunpack.c.l.s4 1934713408
      %v2958 = vunpack.c.0.s8 %v2957
      %v2959 = vperm.slane %v2951, %v2958
      %v2960 = vrot.slane %v2931, 4
      %v2961 = vsel %vm161, %v2960, %v2919
      %v2962 = vrot.slane %v2919, 4
      %v2963 = vsel %vm161, %v2931, %v2962
      %v2965 = vunpack.c.l.s4 1934713408
      %v2966 = vunpack.c.0.s8 %v2965
      %v2967 = vperm.slane %v2961, %v2966
      %v2969 = vunpack.c.l.s4 1934713408
      %v2970 = vunpack.c.0.s8 %v2969
      %v2971 = vperm.slane %v2963, %v2970
      %v2972 = vrot.slane %v2935, 4
      %v2973 = vsel %vm161, %v2972, %v2923
      %v2974 = vrot.slane %v2923, 4
      %v2975 = vsel %vm161, %v2935, %v2974
      %v2977 = vunpack.c.l.s4 1934713408
      %v2978 = vunpack.c.0.s8 %v2977
      %v2979 = vperm.slane %v2973, %v2978
      %v2981 = vunpack.c.l.s4 1934713408
      %v2982 = vunpack.c.0.s8 %v2981
      %v2983 = vperm.slane %v2975, %v2982
      %v2984 = vrot.slane %v2967, 4
      %v2985 = vsel %vm161, %v2984, %v2943
      %v2986 = vrot.slane %v2943, 4
      %v2987 = vsel %vm161, %v2967, %v2986
      %v2988 = vrot.slane %v2971, 4
      %v2989 = vsel %vm161, %v2988, %v2947
      %v2990 = vrot.slane %v2947, 4
      %v2991 = vsel %vm161, %v2971, %v2990
      %v2992 = vrot.slane %v2979, 4
      %v2993 = vsel %vm161, %v2992, %v2955
      %v2994 = vrot.slane %v2955, 4
      %v2995 = vsel %vm161, %v2979, %v2994
      %v2996 = vrot.slane %v2983, 4
      %v2997 = vsel %vm161, %v2996, %v2959
      %v2998 = vrot.slane %v2959, 4
      %v2999 = vsel %vm161, %v2983, %v2998
      %v3000 = vrot.slane %v2851, 4
      %v3001 = vsel %vm161, %v3000, %v2843
      %v3002 = vrot.slane %v2843, 4
      %v3003 = vsel %vm161, %v2851, %v3002
      %v3005 = vunpack.c.l.s4 1983009808
      %v3006 = vunpack.c.0.s8 %v3005
      %v3007 = vperm.slane %v3001, %v3006
      %v3009 = vunpack.c.l.s4 1983009808
      %v3010 = vunpack.c.0.s8 %v3009
      %v3011 = vperm.slane %v3003, %v3010
      %v3012 = vrot.slane %v2855, 4
      %v3013 = vsel %vm161, %v3012, %v2847
      %v3014 = vrot.slane %v2847, 4
      %v3015 = vsel %vm161, %v2855, %v3014
      %v3017 = vunpack.c.l.s4 1983009808
      %v3018 = vunpack.c.0.s8 %v3017
      %v3019 = vperm.slane %v3013, %v3018
      %v3021 = vunpack.c.l.s4 1983009808
      %v3022 = vunpack.c.0.s8 %v3021
      %v3023 = vperm.slane %v3015, %v3022
      %v3024 = vrot.slane %v2867, 4
      %v3025 = vsel %vm161, %v3024, %v2859
      %v3026 = vrot.slane %v2859, 4
      %v3027 = vsel %vm161, %v2867, %v3026
      %v3029 = vunpack.c.l.s4 1983009808
      %v3030 = vunpack.c.0.s8 %v3029
      %v3031 = vperm.slane %v3025, %v3030
      %v3033 = vunpack.c.l.s4 1983009808
      %v3034 = vunpack.c.0.s8 %v3033
      %v3035 = vperm.slane %v3027, %v3034
      %v3036 = vrot.slane %v2871, 4
      %v3037 = vsel %vm161, %v3036, %v2863
      %v3038 = vrot.slane %v2863, 4
      %v3039 = vsel %vm161, %v2871, %v3038
      %v3041 = vunpack.c.l.s4 1983009808
      %v3042 = vunpack.c.0.s8 %v3041
      %v3043 = vperm.slane %v3037, %v3042
      %v3045 = vunpack.c.l.s4 1983009808
      %v3046 = vunpack.c.0.s8 %v3045
      %v3047 = vperm.slane %v3039, %v3046
      %v3048 = vrot.slane %v3019, 4
      %v3049 = vsel %vm161, %v3048, %v3007
      %v3050 = vrot.slane %v3007, 4
      %v3051 = vsel %vm161, %v3019, %v3050
      %v3053 = vunpack.c.l.s4 1934713408
      %v3054 = vunpack.c.0.s8 %v3053
      %v3055 = vperm.slane %v3049, %v3054
      %v3057 = vunpack.c.l.s4 1934713408
      %v3058 = vunpack.c.0.s8 %v3057
      %v3059 = vperm.slane %v3051, %v3058
      %v3060 = vrot.slane %v3023, 4
      %v3061 = vsel %vm161, %v3060, %v3011
      %v3062 = vrot.slane %v3011, 4
      %v3063 = vsel %vm161, %v3023, %v3062
      %v3065 = vunpack.c.l.s4 1934713408
      %v3066 = vunpack.c.0.s8 %v3065
      %v3067 = vperm.slane %v3061, %v3066
      %v3069 = vunpack.c.l.s4 1934713408
      %v3070 = vunpack.c.0.s8 %v3069
      %v3071 = vperm.slane %v3063, %v3070
      %v3072 = vrot.slane %v3043, 4
      %v3073 = vsel %vm161, %v3072, %v3031
      %v3074 = vrot.slane %v3031, 4
      %v3075 = vsel %vm161, %v3043, %v3074
      %v3077 = vunpack.c.l.s4 1934713408
      %v3078 = vunpack.c.0.s8 %v3077
      %v3079 = vperm.slane %v3073, %v3078
      %v3081 = vunpack.c.l.s4 1934713408
      %v3082 = vunpack.c.0.s8 %v3081
      %v3083 = vperm.slane %v3075, %v3082
      %v3084 = vrot.slane %v3047, 4
      %v3085 = vsel %vm161, %v3084, %v3035
      %v3086 = vrot.slane %v3035, 4
      %v3087 = vsel %vm161, %v3047, %v3086
      %v3089 = vunpack.c.l.s4 1934713408
      %v3090 = vunpack.c.0.s8 %v3089
      %v3091 = vperm.slane %v3085, %v3090
      %v3093 = vunpack.c.l.s4 1934713408
      %v3094 = vunpack.c.0.s8 %v3093
      %v3095 = vperm.slane %v3087, %v3094
      %v3096 = vrot.slane %v3079, 4
      %v3097 = vsel %vm161, %v3096, %v3055
      %v3098 = vrot.slane %v3055, 4
      %v3099 = vsel %vm161, %v3079, %v3098
      %v3100 = vrot.slane %v3083, 4
      %v3101 = vsel %vm161, %v3100, %v3059
      %v3102 = vrot.slane %v3059, 4
      %v3103 = vsel %vm161, %v3083, %v3102
      %v3104 = vrot.slane %v3091, 4
      %v3105 = vsel %vm161, %v3104, %v3067
      %v3106 = vrot.slane %v3067, 4
      %v3107 = vsel %vm161, %v3091, %v3106
      %v3108 = vrot.slane %v3095, 4
      %v3109 = vsel %vm161, %v3108, %v3071
      %v3110 = vrot.slane %v3071, 4
      %v3111 = vsel %vm161, %v3095, %v3110
      %3113 = vrot.lane.b32.xlu0 %v2987, 16
      %v3114 = vpop.permute.xlu0 %3113
      %3117 = vrot.lane.b32.xlu0 %v2989, 32
      %v3118 = vpop.permute.xlu0 %3117
      %3121 = vrot.lane.b32.xlu0 %v2991, 48
      %v3122 = vpop.permute.xlu0 %3121
      %3125 = vrot.lane.b32.xlu0 %v2993, 64
      %v3126 = vpop.permute.xlu0 %3125
      %3129 = vrot.lane.b32.xlu0 %v2995, 80
      %v3130 = vpop.permute.xlu0 %3129
      %3133 = vrot.lane.b32.xlu0 %v2997, 96
      %v3134 = vpop.permute.xlu0 %3133
      %3137 = vrot.lane.b32.xlu0 %v2999, 112
      %v3138 = vpop.permute.xlu0 %3137
      %3141 = vrot.lane.b32.xlu0 %v3099, 16
      %v3142 = vpop.permute.xlu0 %3141
      %3145 = vrot.lane.b32.xlu0 %v3101, 32
      %v3146 = vpop.permute.xlu0 %3145
      %3149 = vrot.lane.b32.xlu0 %v3103, 48
      %v3150 = vpop.permute.xlu0 %3149
      %3153 = vrot.lane.b32.xlu0 %v3105, 64
      %v3154 = vpop.permute.xlu0 %3153
      %3157 = vrot.lane.b32.xlu0 %v3107, 80
      %v3158 = vpop.permute.xlu0 %3157
      %3161 = vrot.lane.b32.xlu0 %v3109, 96
      %v3162 = vpop.permute.xlu0 %3161
      %3165 = vrot.lane.b32.xlu0 %v3111, 112
      %v3166 = vpop.permute.xlu0 %3165
      %v3168 = vsel %vm441, %v2985, %v3114
      %v3169 = vsel %vm443, %v3168, %v3118
      %v3170 = vsel %vm445, %v3169, %v3122
      %v3171 = vsel %vm447, %v3170, %v3126
      %v3172 = vsel %vm449, %v3171, %v3130
      %v3173 = vsel %vm451, %v3172, %v3134
      %v3174 = vsel %vm453, %v3173, %v3138
      %v3175 = vsel %vm441, %v3097, %v3142
      %v3176 = vsel %vm443, %v3175, %v3146
      %v3177 = vsel %vm445, %v3176, %v3150
      %v3178 = vsel %vm447, %v3177, %v3154
      %v3179 = vsel %vm449, %v3178, %v3158
      %v3180 = vsel %vm451, %v3179, %v3162
      %v3181 = vsel %vm453, %v3180, %v3166
      %v3182 = vld [vmem:[%s1] sm:$0xff]
      %vm3183 = vcmask 588800
      %v3185 = vsel %vm3183, %v3182, 0
      %3187 = vmatpush.msra.mxu0 0.0
      %3188 = vmatpush.msra.mxu0 0.0
      %3189 = vmatpush.msra.mxu0 0.0
      %3190 = vmatpush.msra.mxu0 0.0
      %3191 = vmatpush.msra.mxu0 0.0
      %3192 = vmatpush.msra.mxu0 0.0
      %3193 = vmatpush.msra.mxu0 0.0
      %3194 = vmatpush.msra.mxu0 %v3174
      %3195 = vmatpush.msra.mxu0 %v2832
      %3196 = vmatpush.msra.mxu0 %v2474
      %3197 = vmatpush.msra.mxu0 %v2164
      %3198 = vmatpush.msra.mxu0 %v1822
      %3199 = vmatpush.msra.mxu0 %v1464
      %3200 = vmatpush.msra.mxu0 %v1154
      %3201 = vmatpush.msra.mxu0 %v812
      %3202 = vmatpush.msra.mxu0 %v454
      %3203 = vmatmul.f32.gmra.mxu0 %v3185
      %v3204 = vpop.f32.mrf.mxu0
      %v3205 = vadd.f32 0.0, %v3204
      %3206 = vdwg.mxu0
      %3207 = vmatpush.msra.mxu0 0.0
      %3208 = vmatpush.msra.mxu0 0.0
      %3209 = vmatpush.msra.mxu0 0.0
      %3210 = vmatpush.msra.mxu0 0.0
      %3211 = vmatpush.msra.mxu0 0.0
      %3212 = vmatpush.msra.mxu0 0.0
      %3213 = vmatpush.msra.mxu0 0.0
      %3214 = vmatpush.msra.mxu0 %v3181
      %3215 = vmatpush.msra.mxu0 %v2839
      %3216 = vmatpush.msra.mxu0 %v2481
      %3217 = vmatpush.msra.mxu0 %v2171
      %3218 = vmatpush.msra.mxu0 %v1829
      %3219 = vmatpush.msra.mxu0 %v1471
      %3220 = vmatpush.msra.mxu0 %v1161
      %3221 = vmatpush.msra.mxu0 %v819
      %3222 = vmatpush.msra.mxu0 %v461
      %3223 = vmatmul.f32.gmra.mxu0 %v3185
      %v3224 = vpop.f32.mrf.mxu0
      %v3225 = vadd.f32 0.0, %v3224
      %3226 = vdwg.mxu0
      %3227 = vst [vmem:[%s143] sm:$0xff] %v3205
      %3228 = vst [vmem:[%s143 + $0x8] sm:$0xff] %v3225
      %p3229 = scmp.lt.s32.totalorder %s13, 1
      %s3230 = scalar_select %p3229, %s13, 1
      %s3231 = smul.addr %s3230, 2
      %s3232 = smul.addr %s3231, 8
      %s3233 = scalar_lea.vmem %s2, %s3232
      // Predicated region
      $region29: #{conv2d_c.1} parent=27 // pred_check
        %p3234 = pneg %p78
      $region30: #{conv2d_c.1} parent=27 // pred_check_branch
        %3236 = sbr.rel (%p3234) target = $region32
      $region31: #{conv2d_c.1} parent=27 // pred_region
        _
      $region32: #{conv2d_c.1} parent=27 // pred_fallthru
        _
    $region28: #{conv2d_c.1} parent=5 // pred_fallthru
      _
    %p3237 = scmp.le.s32.totalorder 2, %s8
    // Predicated region
    $region33: #{conv2d_c.1} parent=5 // pred_check
      %p3238 = pneg %p3237
    $region34: #{conv2d_c.1} parent=5 // pred_check_branch
      %3240 = sbr.rel (%p3238) target = $region36
    $region35: #{conv2d_c.1} parent=5 // pred_region
      %s3241 = ssub.s32 %s8, 2
      // Predicated region
      $region37: #{conv2d_c.1} parent=35 // pred_check
        %p3242 = pneg %p84
      $region38: #{conv2d_c.1} parent=35 // pred_check_branch
        %3244 = sbr.rel (%p3242) target = $region40
      $region39: #{conv2d_c.1} parent=35 // pred_region
        %p3245 = scmp.lt.s32.totalorder %s14, 1
        %s3246 = scalar_select %p3245, %s14, 1
        %s3247 = smul.addr %s3246, 2
        %s3248 = smul.addr %s3247, 8
        %s3249 = scalar_lea.vmem %s2, %s3248
      $region40: #{conv2d_c.1} parent=35 // pred_fallthru
        _
    $region36: #{conv2d_c.1} parent=5 // pred_fallthru
      _
  $region6: #{conv2d_c.1} parent=0 // loop_footer
    %s12 = sadd.s32 1, %s8
  $region7: #{conv2d_c.1} parent=0 // loop_footer_branch
    %7 = sbr.rel target = $region3
  $region8: #{conv2d_c.1} parent=0 // loop_exit
    _

</llo_original>
